<compile_context>
chip_gen: v6e
topology: v6e:2x2x1
jax: 0.10.0
libtpu: 0.0.40
codegen_flags: <defaults>
</compile_context>

<pallas_src>
import math
from functools import partial

import jax
import jax.numpy as jnp
from jax import lax
from jax.experimental import pallas as pl
from jax.experimental.pallas import tpu as pltpu

# ---- hyper-parameters (small, consistent with the module defaults) ----
D_MODEL = 32
HEADS = 4
DIM_FF = 128
HEAD_DIM = D_MODEL // HEADS
SEQ = 8
BATCH = 2
EPS = 1e-5
LANES = 128


# ---------------------------------------------------------------------------
# in-kernel math helpers
# ---------------------------------------------------------------------------
def _erf(x):
    # Abramowitz & Stegun 7.1.26 polynomial (max abs err ~1.5e-7); exp-only so it
    # lowers cleanly in Mosaic.  (tanh-form GELU would move work to the EUP but
    # deviates from the exact-erf nn.GELU(); kept exact for accuracy.)
    a1, a2, a3, a4, a5 = (0.254829592, -0.284496736, 1.421413741,
                          -1.453152027, 1.061405429)
    p = 0.3275911
    sign = jnp.where(x >= 0.0, 1.0, -1.0)
    ax = jnp.abs(x)
    t = 1.0 / (1.0 + p * ax)
    poly = ((((a5 * t + a4) * t + a3) * t + a2) * t + a1) * t
    return sign * (1.0 - poly * jnp.exp(-ax * ax))


def _gelu_exact(x):
    # matches nn.GELU() (exact erf form) to ~1e-7
    return 0.5 * x * (1.0 + _erf(x * (1.0 / math.sqrt(2.0))))


def _batchnorm(y2d, gamma, beta):
    # BatchNorm1d(d_model) in training mode: per-channel stats over all tokens,
    # biased variance, eps=1e-5.  Single-pass stats (var = E[x^2] - mu^2); the
    # inputs here are ~zero-mean so there is no cancellation concern, and it
    # halves the cross-sublane XLU reductions per BN call.
    mu = jnp.mean(y2d, axis=0, keepdims=True)
    ms = jnp.mean(y2d * y2d, axis=0, keepdims=True)
    var = ms - mu * mu
    return (y2d - mu) * lax.rsqrt(var + EPS) * gamma + beta


# ---------------------------------------------------------------------------
# the fused Pallas kernel: whole layer in one invocation (everything fits VMEM;
# footprint ~80 KB, far below even the v7x 64 MiB / 32 MiB scoped limit)
# ---------------------------------------------------------------------------
def encoder_kernel(x_ref, w_ref, v_ref, out_ref, *, batch, seq, heads):
    N, D = x_ref.shape                     # N = batch*seq, rows s-major (s*batch + b)
    FF = DIM_FF
    dh = D // heads

    # --- unpack the bf16 MXU-operand slab (static, tile-aligned slices) ---
    wqkv = w_ref[0:D, 0:3 * D]             # (D, 3D)   cols = [q|k|v]
    wo = w_ref[D:2 * D, 0:D]               # (D, D)    rows in concat-head order
    w1 = w_ref[2 * D:3 * D, 0:FF]          # (D, FF)
    w2 = w_ref[3 * D:3 * D + FF, 0:D]      # (FF, D)

    # --- unpack the small f32 slab (biases / BN affine / permutations) ---
    bqkv = v_ref[0:1, 0:3 * D]
    b1 = v_ref[1:2, 0:FF]
    bo = v_ref[2:3, 0:D]
    b2 = v_ref[3:4, 0:D]
    g1 = v_ref[4:5, 0:D]
    be1 = v_ref[5:6, 0:D]
    g2 = v_ref[6:7, 0:D]
    be2 = v_ref[7:8, 0:D]
    P = v_ref[8:8 + N, 0:N]                # s-major rows -> b-major rows (0/1)
    Pt = v_ref[8 + N:8 + 2 * N, 0:N]       # inverse permutation

    x_s = x_ref[...]                       # (N, D) f32, s-major token order

    # --- fused QKV projection: one MXU pass, bf16 operands, f32 accumulation ---
    qkv_s = jnp.dot(x_s.astype(jnp.bfloat16), wqkv,
                    preferred_element_type=jnp.float32) + bqkv      # (N, 3D)

    # Attention needs batch-major token order; BN / FFN / residuals are
    # token-order invariant, so only qkv and the attention output are re-ordered,
    # as tiny f32 permutation matmuls on the otherwise-idle MXU.  This keeps the
    # wrapper free of separate XLA transpose ops and leaves the f32 residual
    # path (x_s) untouched by any bf16-fed matmul.
    qkv_b = jnp.dot(P, qkv_s, preferred_element_type=jnp.float32)   # (N, 3D)

    q = qkv_b[:, 0:D].reshape(batch, seq, D).astype(jnp.bfloat16)
    k = qkv_b[:, D:2 * D].reshape(batch, seq, D).astype(jnp.bfloat16)
    v = qkv_b[:, 2 * D:3 * D].reshape(batch, seq, D).astype(jnp.bfloat16)

    # --- multi-head attention (static 4-way head loop; see header note) ---
    scale = 1.0 / math.sqrt(dh)
    ctx_parts = []
    for h in range(heads):
        sl = slice(h * dh, (h + 1) * dh)
        s = jnp.einsum('bqd,bkd->bqk', q[:, :, sl], k[:, :, sl],
                       preferred_element_type=jnp.float32) * scale
        s = s - jnp.max(s, axis=-1, keepdims=True)
        p = jnp.exp(s)
        p = p * pl.reciprocal(jnp.sum(p, axis=-1, keepdims=True), approx=True)
        ctx = jnp.einsum('bqk,bkd->bqd', p.astype(jnp.bfloat16), v[:, :, sl],
                         preferred_element_type=jnp.float32)        # (B, S, dh)
        ctx_parts.append(ctx.reshape(N, dh))

    # single (N,D)x(D,D) output projection instead of `heads` accumulated K=dh dots
    ctx_all = jnp.concatenate(ctx_parts, axis=-1).astype(jnp.bfloat16)   # (N, D)
    attn_b = jnp.dot(ctx_all, wo, preferred_element_type=jnp.float32)
    attn_s = jnp.dot(Pt, attn_b, preferred_element_type=jnp.float32) + bo

    # --- residual + norm1 (dropout1 == identity) ---
    y = _batchnorm(x_s + attn_s, g1, be1)

    # --- feed-forward: fc2(dropout(GELU(fc1(y)))) ---
    h1 = jnp.dot(y.astype(jnp.bfloat16), w1,
                 preferred_element_type=jnp.float32) + b1
    h1 = _gelu_exact(h1)
    y2 = jnp.dot(h1.astype(jnp.bfloat16), w2,
                 preferred_element_type=jnp.float32) + b2

    # --- residual + norm2 (dropout2 == identity); output stays s-major ---
    out_ref[...] = _batchnorm(y + y2, g2, be2)


# ---------------------------------------------------------------------------
# one-time parameter preparation: all transposes / packing hoisted here.
# Two slabs only: bf16 weights (MXU operands) + f32 vectors/permutations.
# ---------------------------------------------------------------------------
def prepare_params(params, seq=SEQ, batch=BATCH):
    D, FF = D_MODEL, DIM_FF
    N = seq * batch

    # bf16 weight slab: [wqkv; wo; w1; w2] stacked on sublanes, 128-lane padded.
    # Block row offsets (0, D, 2D, 3D) are multiples of 16 -> bf16-tile aligned.
    wslab = jnp.zeros((3 * D + FF, LANES), jnp.float32)
    wslab = wslab.at[0:D, 0:3 * D].set(params['in_proj_w'].T.astype(jnp.float32))
    wslab = wslab.at[D:2 * D, 0:D].set(params['out_proj_w'].T.astype(jnp.float32))
    wslab = wslab.at[2 * D:3 * D, 0:FF].set(params['fc1_w'].T.astype(jnp.float32))
    wslab = wslab.at[3 * D:3 * D + FF, 0:D].set(params['fc2_w'].T.astype(jnp.float32))
    wslab = wslab.astype(jnp.bfloat16)

    # f32 slab: biases, BN affine, and the s-major <-> b-major permutation matrices.
    vslab = jnp.zeros((8 + 2 * N, LANES), jnp.float32)
    vslab = vslab.at[0, 0:3 * D].set(params['in_proj_b'].astype(jnp.float32))
    vslab = vslab.at[1, 0:FF].set(params['fc1_b'].astype(jnp.float32))
    vslab = vslab.at[2, 0:D].set(params['out_proj_b'].astype(jnp.float32))
    vslab = vslab.at[3, 0:D].set(params['fc2_b'].astype(jnp.float32))
    vslab = vslab.at[4, 0:D].set(params['bn1_gamma'].astype(jnp.float32))
    vslab = vslab.at[5, 0:D].set(params['bn1_beta'].astype(jnp.float32))
    vslab = vslab.at[6, 0:D].set(params['bn2_gamma'].astype(jnp.float32))
    vslab = vslab.at[7, 0:D].set(params['bn2_beta'].astype(jnp.float32))

    # P[i, j] = 1 where b-major row i (= b*S + s) pulls s-major row j = s*B + b
    i = jnp.arange(N)
    src = (i % seq) * batch + i // seq
    P = jnp.zeros((N, N), jnp.float32).at[i, src].set(1.0)
    vslab = vslab.at[8:8 + N, 0:N].set(P)
    vslab = vslab.at[8 + N:8 + 2 * N, 0:N].set(P.T)

    return (wslab, vslab)


# ---------------------------------------------------------------------------
# forward wrapper: no transposes — just a free contiguous reshape + pallas_call
# ---------------------------------------------------------------------------
@jax.jit
def encoder_mtsc_forward(src_sbd, prep):
    """src_sbd: (seq_len, batch, d_model) — PyTorch module convention."""
    S, B, D = src_sbd.shape
    N, FF = S * B, DIM_FF
    wslab, vslab = prep
    x2 = src_sbd.reshape(N, D).astype(jnp.float32)   # contiguous view, s-major rows

    flops = (2 * N * D * 3 * D            # qkv projection
             + 2 * N * N * 3 * D          # s->b permutation of qkv
             + 2 * N * S * D * 2          # scores + contexts (all heads)
             + 2 * N * D * D              # output projection
             + 2 * N * N * D              # b->s permutation
             + 2 * N * D * FF * 2)        # fc1 + fc2
    transcendentals = HEADS * B * S * S + N * FF + 2 * N
    bytes_accessed = 2 * N * D * 4 + wslab.size * 2 + vslab.size * 4

    kernel = partial(encoder_kernel, batch=B, seq=S, heads=HEADS)
    out2 = pl.pallas_call(
        kernel,
        out_shape=jax.ShapeDtypeStruct((N, D), jnp.float32),
        in_specs=[pl.BlockSpec(memory_space=pltpu.MemorySpace.VMEM)
                  for _ in range(3)],
        out_specs=pl.BlockSpec(memory_space=pltpu.MemorySpace.VMEM),
        cost_estimate=pl.CostEstimate(flops=int(flops),
                                      transcendentals=int(transcendentals),
                                      bytes_accessed=int(bytes_accessed)),
    )(x2, wslab, vslab)

    return out2.reshape(S, B, D)                     # s-major -> free reshape back


# ---------------------------------------------------------------------------
# deterministic parameter init (shapes match the PyTorch module __init__)
# ---------------------------------------------------------------------------
def init_params(key):
    ks = jax.random.split(key, 8)

    def rnd(k, shape, scale=0.1):
        return (scale * jax.random.normal(k, shape)).astype(jnp.float32)

    return dict(
        in_proj_w=rnd(ks[0], (3 * D_MODEL, D_MODEL)),
        in_proj_b=rnd(ks[1], (3 * D_MODEL,)),
        out_proj_w=rnd(ks[2], (D_MODEL, D_MODEL)),
        out_proj_b=rnd(ks[3], (D_MODEL,)),
        fc1_w=rnd(ks[4], (DIM_FF, D_MODEL)),
        fc1_b=rnd(ks[5], (DIM_FF,)),
        fc2_w=rnd(ks[6], (D_MODEL, DIM_FF)),
        fc2_b=rnd(ks[7], (D_MODEL,)),
        bn1_gamma=jnp.ones((D_MODEL,), jnp.float32),
        bn1_beta=jnp.zeros((D_MODEL,), jnp.float32),
        bn2_gamma=jnp.ones((D_MODEL,), jnp.float32),
        bn2_beta=jnp.zeros((D_MODEL,), jnp.float32),
    )


# ---------------------------------------------------------------------------
# pure-JAX f32 reference (same semantics) for a sanity check
# ---------------------------------------------------------------------------
def reference_forward(src_sbd, params):
    S, B, D = src_sbd.shape
    x = src_sbd.astype(jnp.float32)
    qkv = x @ params['in_proj_w'].T + params['in_proj_b']        # (S, B, 3D)
    q, k, v = jnp.split(qkv, 3, axis=-1)

    def split_heads(t):  # (S, B, D) -> (B, H, S, dh)
        return t.reshape(S, B, HEADS, HEAD_DIM).transpose(1, 2, 0, 3)

    qh, kh, vh = map(split_heads, (q, k, v))
    s = jnp.einsum('bhqd,bhkd->bhqk', qh, kh) / math.sqrt(HEAD_DIM)
    p = jax.nn.softmax(s, axis=-1)
    ctx = jnp.einsum('bhqk,bhkd->bhqd', p, vh)
    ctx = ctx.transpose(2, 0, 1, 3).reshape(S, B, D)
    attn = ctx @ params['out_proj_w'].T + params['out_proj_b']

    def bn(t, g, b):  # stats over (seq, batch), per channel
        mu = t.mean(axis=(0, 1), keepdims=True)
        var = ((t - mu) ** 2).mean(axis=(0, 1), keepdims=True)
        return (t - mu) / jnp.sqrt(var + EPS) * g + b

    src = bn(x + attn, params['bn1_gamma'], params['bn1_beta'])
    h = jax.nn.gelu(src @ params['fc1_w'].T + params['fc1_b'], approximate=False)
    src2 = h @ params['fc2_w'].T + params['fc2_b']
    src = bn(src + src2, params['bn2_gamma'], params['bn2_beta'])
    return src


if __name__ == "__main__":
    key = jax.random.PRNGKey(0)
    k_x, k_p = jax.random.split(key)
    # module input convention: (seq_len, batch, d_model)
    src = jax.random.normal(k_x, (SEQ, BATCH, D_MODEL), dtype=jnp.float32)
    params = init_params(k_p)
    prep = prepare_params(params, seq=SEQ, batch=BATCH)   # one-time packing

    out = jax.block_until_ready(encoder_mtsc_forward(src, prep))
    ref = jax.block_until_ready(reference_forward(src, params))

    max_err = float(jnp.max(jnp.abs(out - ref)))
    assert out.shape == (SEQ, BATCH, D_MODEL), out.shape
    assert jnp.all(jnp.isfinite(out))
    # bf16 MXU operands (per perf review) + approx softmax reciprocal => expect
    # ~1e-3-level deviations from the pure-f32 reference; bound set with margin.
    assert max_err < 1e-2, f"max abs error vs reference: {max_err}"

    print("KERNEL_OK")
</pallas_src>

<mosaic_0001>
module attributes {stable_mosaic.version = 11 : i64} {
  func.func @encoder_kernel(%arg0: memref<16x32xf32, #tpu.memory_space<vmem>>, %arg1: memref<224x128xbf16, #tpu.memory_space<vmem>>, %arg2: memref<40x128xf32, #tpu.memory_space<vmem>>, %arg3: memref<16x32xf32, #tpu.memory_space<vmem>>) attributes {dimension_semantics = [], scalar_prefetch = 0 : i64, scratch_operands = 0 : i64, tpu.core_type = #tpu.core_type<tc>} {
    %c0 = arith.constant 0 : index
    %c0_0 = arith.constant 0 : index
    %0 = vector.load %arg1[%c0, %c0_0] : memref<224x128xbf16, #tpu.memory_space<vmem>>, vector<32x96xbf16>
    %c32 = arith.constant 32 : index
    %c0_1 = arith.constant 0 : index
    %1 = vector.load %arg1[%c32, %c0_1] : memref<224x128xbf16, #tpu.memory_space<vmem>>, vector<32x32xbf16>
    %c64 = arith.constant 64 : index
    %c0_2 = arith.constant 0 : index
    %2 = vector.load %arg1[%c64, %c0_2] : memref<224x128xbf16, #tpu.memory_space<vmem>>, vector<32x128xbf16>
    %c96 = arith.constant 96 : index
    %c0_3 = arith.constant 0 : index
    %3 = vector.load %arg1[%c96, %c0_3] : memref<224x128xbf16, #tpu.memory_space<vmem>>, vector<128x32xbf16>
    %c0_4 = arith.constant 0 : index
    %c0_5 = arith.constant 0 : index
    %4 = vector.load %arg2[%c0_4, %c0_5] : memref<40x128xf32, #tpu.memory_space<vmem>>, vector<1x96xf32>
    %c1 = arith.constant 1 : index
    %c0_6 = arith.constant 0 : index
    %5 = vector.load %arg2[%c1, %c0_6] : memref<40x128xf32, #tpu.memory_space<vmem>>, vector<1x128xf32>
    %c2 = arith.constant 2 : index
    %c0_7 = arith.constant 0 : index
    %6 = vector.load %arg2[%c2, %c0_7] : memref<40x128xf32, #tpu.memory_space<vmem>>, vector<1x32xf32>
    %c3 = arith.constant 3 : index
    %c0_8 = arith.constant 0 : index
    %7 = vector.load %arg2[%c3, %c0_8] : memref<40x128xf32, #tpu.memory_space<vmem>>, vector<1x32xf32>
    %c4 = arith.constant 4 : index
    %c0_9 = arith.constant 0 : index
    %8 = vector.load %arg2[%c4, %c0_9] : memref<40x128xf32, #tpu.memory_space<vmem>>, vector<1x32xf32>
    %c5 = arith.constant 5 : index
    %c0_10 = arith.constant 0 : index
    %9 = vector.load %arg2[%c5, %c0_10] : memref<40x128xf32, #tpu.memory_space<vmem>>, vector<1x32xf32>
    %c6 = arith.constant 6 : index
    %c0_11 = arith.constant 0 : index
    %10 = vector.load %arg2[%c6, %c0_11] : memref<40x128xf32, #tpu.memory_space<vmem>>, vector<1x32xf32>
    %c7 = arith.constant 7 : index
    %c0_12 = arith.constant 0 : index
    %11 = vector.load %arg2[%c7, %c0_12] : memref<40x128xf32, #tpu.memory_space<vmem>>, vector<1x32xf32>
    %c8 = arith.constant 8 : index
    %c0_13 = arith.constant 0 : index
    %12 = vector.load %arg2[%c8, %c0_13] : memref<40x128xf32, #tpu.memory_space<vmem>>, vector<16x16xf32>
    %c24 = arith.constant 24 : index
    %c0_14 = arith.constant 0 : index
    %13 = vector.load %arg2[%c24, %c0_14] : memref<40x128xf32, #tpu.memory_space<vmem>>, vector<16x16xf32>
    %c0_15 = arith.constant 0 : index
    %c0_16 = arith.constant 0 : index
    %14 = vector.load %arg0[%c0_15, %c0_16] : memref<16x32xf32, #tpu.memory_space<vmem>>, vector<16x32xf32>
    %15 = arith.truncf %14 : vector<16x32xf32> to vector<16x32xbf16>
    %cst = arith.constant dense<0.000000e+00> : vector<16x96xf32>
    %16 = tpu.matmul %15, %0, %cst {dimension_numbers = #tpu.dot_dimension_numbers<[1], [0], [0], [1], [0, 0, 1, 1], [], []>} : vector<16x32xbf16>, vector<32x96xbf16>, vector<16x96xf32> -> vector<16x96xf32>
    %17 = vector.broadcast %4 : vector<1x96xf32> to vector<16x96xf32>
    %18 = arith.addf %16, %17 : vector<16x96xf32>
    %cst_17 = arith.constant dense<0.000000e+00> : vector<16x96xf32>
    %19 = tpu.matmul %12, %18, %cst_17 {dimension_numbers = #tpu.dot_dimension_numbers<[1], [0], [0], [1], [0, 0, 1, 1], [], []>} : vector<16x16xf32>, vector<16x96xf32>, vector<16x96xf32> -> vector<16x96xf32>
    %20 = vector.extract_strided_slice %19 {offsets = [0, 0], sizes = [16, 32], strides = [1, 1]} : vector<16x96xf32> to vector<16x32xf32>
    %21 = vector.shape_cast %20 : vector<16x32xf32> to vector<2x8x32xf32>
    %22 = arith.truncf %21 : vector<2x8x32xf32> to vector<2x8x32xbf16>
    %23 = vector.extract_strided_slice %19 {offsets = [0, 32], sizes = [16, 32], strides = [1, 1]} : vector<16x96xf32> to vector<16x32xf32>
    %24 = vector.shape_cast %23 : vector<16x32xf32> to vector<2x8x32xf32>
    %25 = arith.truncf %24 : vector<2x8x32xf32> to vector<2x8x32xbf16>
    %26 = vector.extract_strided_slice %19 {offsets = [0, 64], sizes = [16, 32], strides = [1, 1]} : vector<16x96xf32> to vector<16x32xf32>
    %27 = vector.shape_cast %26 : vector<16x32xf32> to vector<2x8x32xf32>
    %28 = arith.truncf %27 : vector<2x8x32xf32> to vector<2x8x32xbf16>
    %29 = vector.extract_strided_slice %22 {offsets = [0, 0, 0], sizes = [2, 8, 8], strides = [1, 1, 1]} : vector<2x8x32xbf16> to vector<2x8x8xbf16>
    %30 = vector.extract_strided_slice %25 {offsets = [0, 0, 0], sizes = [2, 8, 8], strides = [1, 1, 1]} : vector<2x8x32xbf16> to vector<2x8x8xbf16>
    "tpu.trace_start"() <{level = 10 : i32, message = "bqd,bkd->bqk"}> : () -> ()
    %cst_18 = arith.constant dense<0.000000e+00> : vector<2x8x8xf32>
    %31 = tpu.matmul %29, %30, %cst_18 {dimension_numbers = #tpu.dot_dimension_numbers<[2], [2], [1], [1], [0, 0, 0, 1, 1, 1], [0], [0]>} : vector<2x8x8xbf16>, vector<2x8x8xbf16>, vector<2x8x8xf32> -> vector<2x8x8xf32>
    "tpu.trace_stop"() : () -> ()
    %cst_19 = arith.constant 0.353553385 : f32
    %32 = vector.broadcast %cst_19 : f32 to vector<2x8x8xf32>
    %33 = arith.mulf %31, %32 : vector<2x8x8xf32>
    %cst_20 = arith.constant dense<0xFF800000> : vector<2x8xf32>
    %34 = vector.multi_reduction <maximumf>, %33, %cst_20 [2] : vector<2x8x8xf32> to vector<2x8xf32>
    %35 = vector.shape_cast %34 : vector<2x8xf32> to vector<2x8x1xf32>
    %36 = vector.broadcast %35 : vector<2x8x1xf32> to vector<2x8x8xf32>
    %37 = arith.subf %33, %36 : vector<2x8x8xf32>
    %38 = math.exp %37 : vector<2x8x8xf32>
    %cst_21 = arith.constant dense<0.000000e+00> : vector<2x8xf32>
    %39 = vector.multi_reduction <add>, %38, %cst_21 [2] : vector<2x8x8xf32> to vector<2x8xf32>
    %40 = vector.shape_cast %39 : vector<2x8xf32> to vector<2x8x1xf32>
    %41 = tpu.reciprocal %40 {approx = true} : vector<2x8x1xf32> -> vector<2x8x1xf32>
    %42 = vector.broadcast %41 : vector<2x8x1xf32> to vector<2x8x8xf32>
    %43 = arith.mulf %38, %42 : vector<2x8x8xf32>
    %44 = arith.truncf %43 : vector<2x8x8xf32> to vector<2x8x8xbf16>
    %45 = vector.extract_strided_slice %28 {offsets = [0, 0, 0], sizes = [2, 8, 8], strides = [1, 1, 1]} : vector<2x8x32xbf16> to vector<2x8x8xbf16>
    "tpu.trace_start"() <{level = 10 : i32, message = "bqk,bkd->bqd"}> : () -> ()
    %cst_22 = arith.constant dense<0.000000e+00> : vector<2x8x8xf32>
    %46 = tpu.matmul %44, %45, %cst_22 {dimension_numbers = #tpu.dot_dimension_numbers<[2], [1], [1], [2], [0, 0, 0, 1, 1, 2], [0], [0]>} : vector<2x8x8xbf16>, vector<2x8x8xbf16>, vector<2x8x8xf32> -> vector<2x8x8xf32>
    "tpu.trace_stop"() : () -> ()
    %47 = vector.shape_cast %46 : vector<2x8x8xf32> to vector<16x8xf32>
    %48 = vector.extract_strided_slice %22 {offsets = [0, 0, 8], sizes = [2, 8, 8], strides = [1, 1, 1]} : vector<2x8x32xbf16> to vector<2x8x8xbf16>
    %49 = vector.extract_strided_slice %25 {offsets = [0, 0, 8], sizes = [2, 8, 8], strides = [1, 1, 1]} : vector<2x8x32xbf16> to vector<2x8x8xbf16>
    "tpu.trace_start"() <{level = 10 : i32, message = "bqd,bkd->bqk"}> : () -> ()
    %cst_23 = arith.constant dense<0.000000e+00> : vector<2x8x8xf32>
    %50 = tpu.matmul %48, %49, %cst_23 {dimension_numbers = #tpu.dot_dimension_numbers<[2], [2], [1], [1], [0, 0, 0, 1, 1, 1], [0], [0]>} : vector<2x8x8xbf16>, vector<2x8x8xbf16>, vector<2x8x8xf32> -> vector<2x8x8xf32>
    "tpu.trace_stop"() : () -> ()
    %cst_24 = arith.constant 0.353553385 : f32
    %51 = vector.broadcast %cst_24 : f32 to vector<2x8x8xf32>
    %52 = arith.mulf %50, %51 : vector<2x8x8xf32>
    %cst_25 = arith.constant dense<0xFF800000> : vector<2x8xf32>
    %53 = vector.multi_reduction <maximumf>, %52, %cst_25 [2] : vector<2x8x8xf32> to vector<2x8xf32>
    %54 = vector.shape_cast %53 : vector<2x8xf32> to vector<2x8x1xf32>
    %55 = vector.broadcast %54 : vector<2x8x1xf32> to vector<2x8x8xf32>
    %56 = arith.subf %52, %55 : vector<2x8x8xf32>
    %57 = math.exp %56 : vector<2x8x8xf32>
    %cst_26 = arith.constant dense<0.000000e+00> : vector<2x8xf32>
    %58 = vector.multi_reduction <add>, %57, %cst_26 [2] : vector<2x8x8xf32> to vector<2x8xf32>
    %59 = vector.shape_cast %58 : vector<2x8xf32> to vector<2x8x1xf32>
    %60 = tpu.reciprocal %59 {approx = true} : vector<2x8x1xf32> -> vector<2x8x1xf32>
    %61 = vector.broadcast %60 : vector<2x8x1xf32> to vector<2x8x8xf32>
    %62 = arith.mulf %57, %61 : vector<2x8x8xf32>
    %63 = arith.truncf %62 : vector<2x8x8xf32> to vector<2x8x8xbf16>
    %64 = vector.extract_strided_slice %28 {offsets = [0, 0, 8], sizes = [2, 8, 8], strides = [1, 1, 1]} : vector<2x8x32xbf16> to vector<2x8x8xbf16>
    "tpu.trace_start"() <{level = 10 : i32, message = "bqk,bkd->bqd"}> : () -> ()
    %cst_27 = arith.constant dense<0.000000e+00> : vector<2x8x8xf32>
    %65 = tpu.matmul %63, %64, %cst_27 {dimension_numbers = #tpu.dot_dimension_numbers<[2], [1], [1], [2], [0, 0, 0, 1, 1, 2], [0], [0]>} : vector<2x8x8xbf16>, vector<2x8x8xbf16>, vector<2x8x8xf32> -> vector<2x8x8xf32>
    "tpu.trace_stop"() : () -> ()
    %66 = vector.shape_cast %65 : vector<2x8x8xf32> to vector<16x8xf32>
    %67 = vector.extract_strided_slice %22 {offsets = [0, 0, 16], sizes = [2, 8, 8], strides = [1, 1, 1]} : vector<2x8x32xbf16> to vector<2x8x8xbf16>
    %68 = vector.extract_strided_slice %25 {offsets = [0, 0, 16], sizes = [2, 8, 8], strides = [1, 1, 1]} : vector<2x8x32xbf16> to vector<2x8x8xbf16>
    "tpu.trace_start"() <{level = 10 : i32, message = "bqd,bkd->bqk"}> : () -> ()
    %cst_28 = arith.constant dense<0.000000e+00> : vector<2x8x8xf32>
    %69 = tpu.matmul %67, %68, %cst_28 {dimension_numbers = #tpu.dot_dimension_numbers<[2], [2], [1], [1], [0, 0, 0, 1, 1, 1], [0], [0]>} : vector<2x8x8xbf16>, vector<2x8x8xbf16>, vector<2x8x8xf32> -> vector<2x8x8xf32>
    "tpu.trace_stop"() : () -> ()
    %cst_29 = arith.constant 0.353553385 : f32
    %70 = vector.broadcast %cst_29 : f32 to vector<2x8x8xf32>
    %71 = arith.mulf %69, %70 : vector<2x8x8xf32>
    %cst_30 = arith.constant dense<0xFF800000> : vector<2x8xf32>
    %72 = vector.multi_reduction <maximumf>, %71, %cst_30 [2] : vector<2x8x8xf32> to vector<2x8xf32>
    %73 = vector.shape_cast %72 : vector<2x8xf32> to vector<2x8x1xf32>
    %74 = vector.broadcast %73 : vector<2x8x1xf32> to vector<2x8x8xf32>
    %75 = arith.subf %71, %74 : vector<2x8x8xf32>
    %76 = math.exp %75 : vector<2x8x8xf32>
    %cst_31 = arith.constant dense<0.000000e+00> : vector<2x8xf32>
    %77 = vector.multi_reduction <add>, %76, %cst_31 [2] : vector<2x8x8xf32> to vector<2x8xf32>
    %78 = vector.shape_cast %77 : vector<2x8xf32> to vector<2x8x1xf32>
    %79 = tpu.reciprocal %78 {approx = true} : vector<2x8x1xf32> -> vector<2x8x1xf32>
    %80 = vector.broadcast %79 : vector<2x8x1xf32> to vector<2x8x8xf32>
    %81 = arith.mulf %76, %80 : vector<2x8x8xf32>
    %82 = arith.truncf %81 : vector<2x8x8xf32> to vector<2x8x8xbf16>
    %83 = vector.extract_strided_slice %28 {offsets = [0, 0, 16], sizes = [2, 8, 8], strides = [1, 1, 1]} : vector<2x8x32xbf16> to vector<2x8x8xbf16>
    "tpu.trace_start"() <{level = 10 : i32, message = "bqk,bkd->bqd"}> : () -> ()
    %cst_32 = arith.constant dense<0.000000e+00> : vector<2x8x8xf32>
    %84 = tpu.matmul %82, %83, %cst_32 {dimension_numbers = #tpu.dot_dimension_numbers<[2], [1], [1], [2], [0, 0, 0, 1, 1, 2], [0], [0]>} : vector<2x8x8xbf16>, vector<2x8x8xbf16>, vector<2x8x8xf32> -> vector<2x8x8xf32>
    "tpu.trace_stop"() : () -> ()
    %85 = vector.shape_cast %84 : vector<2x8x8xf32> to vector<16x8xf32>
    %86 = vector.extract_strided_slice %22 {offsets = [0, 0, 24], sizes = [2, 8, 8], strides = [1, 1, 1]} : vector<2x8x32xbf16> to vector<2x8x8xbf16>
    %87 = vector.extract_strided_slice %25 {offsets = [0, 0, 24], sizes = [2, 8, 8], strides = [1, 1, 1]} : vector<2x8x32xbf16> to vector<2x8x8xbf16>
    "tpu.trace_start"() <{level = 10 : i32, message = "bqd,bkd->bqk"}> : () -> ()
    %cst_33 = arith.constant dense<0.000000e+00> : vector<2x8x8xf32>
    %88 = tpu.matmul %86, %87, %cst_33 {dimension_numbers = #tpu.dot_dimension_numbers<[2], [2], [1], [1], [0, 0, 0, 1, 1, 1], [0], [0]>} : vector<2x8x8xbf16>, vector<2x8x8xbf16>, vector<2x8x8xf32> -> vector<2x8x8xf32>
    "tpu.trace_stop"() : () -> ()
    %cst_34 = arith.constant 0.353553385 : f32
    %89 = vector.broadcast %cst_34 : f32 to vector<2x8x8xf32>
    %90 = arith.mulf %88, %89 : vector<2x8x8xf32>
    %cst_35 = arith.constant dense<0xFF800000> : vector<2x8xf32>
    %91 = vector.multi_reduction <maximumf>, %90, %cst_35 [2] : vector<2x8x8xf32> to vector<2x8xf32>
    %92 = vector.shape_cast %91 : vector<2x8xf32> to vector<2x8x1xf32>
    %93 = vector.broadcast %92 : vector<2x8x1xf32> to vector<2x8x8xf32>
    %94 = arith.subf %90, %93 : vector<2x8x8xf32>
    %95 = math.exp %94 : vector<2x8x8xf32>
    %cst_36 = arith.constant dense<0.000000e+00> : vector<2x8xf32>
    %96 = vector.multi_reduction <add>, %95, %cst_36 [2] : vector<2x8x8xf32> to vector<2x8xf32>
    %97 = vector.shape_cast %96 : vector<2x8xf32> to vector<2x8x1xf32>
    %98 = tpu.reciprocal %97 {approx = true} : vector<2x8x1xf32> -> vector<2x8x1xf32>
    %99 = vector.broadcast %98 : vector<2x8x1xf32> to vector<2x8x8xf32>
    %100 = arith.mulf %95, %99 : vector<2x8x8xf32>
    %101 = arith.truncf %100 : vector<2x8x8xf32> to vector<2x8x8xbf16>
    %102 = vector.extract_strided_slice %28 {offsets = [0, 0, 24], sizes = [2, 8, 8], strides = [1, 1, 1]} : vector<2x8x32xbf16> to vector<2x8x8xbf16>
    "tpu.trace_start"() <{level = 10 : i32, message = "bqk,bkd->bqd"}> : () -> ()
    %cst_37 = arith.constant dense<0.000000e+00> : vector<2x8x8xf32>
    %103 = tpu.matmul %101, %102, %cst_37 {dimension_numbers = #tpu.dot_dimension_numbers<[2], [1], [1], [2], [0, 0, 0, 1, 1, 2], [0], [0]>} : vector<2x8x8xbf16>, vector<2x8x8xbf16>, vector<2x8x8xf32> -> vector<2x8x8xf32>
    "tpu.trace_stop"() : () -> ()
    %104 = vector.shape_cast %103 : vector<2x8x8xf32> to vector<16x8xf32>
    %105 = tpu.concatenate %47, %66, %85, %104 in 1 : vector<16x8xf32>, vector<16x8xf32>, vector<16x8xf32>, vector<16x8xf32> -> vector<16x32xf32>
    %106 = arith.truncf %105 : vector<16x32xf32> to vector<16x32xbf16>
    %cst_38 = arith.constant dense<0.000000e+00> : vector<16x32xf32>
    %107 = tpu.matmul %106, %1, %cst_38 {dimension_numbers = #tpu.dot_dimension_numbers<[1], [0], [0], [1], [0, 0, 1, 1], [], []>} : vector<16x32xbf16>, vector<32x32xbf16>, vector<16x32xf32> -> vector<16x32xf32>
    %cst_39 = arith.constant dense<0.000000e+00> : vector<16x32xf32>
    %108 = tpu.matmul %13, %107, %cst_39 {dimension_numbers = #tpu.dot_dimension_numbers<[1], [0], [0], [1], [0, 0, 1, 1], [], []>} : vector<16x16xf32>, vector<16x32xf32>, vector<16x32xf32> -> vector<16x32xf32>
    %109 = vector.broadcast %6 : vector<1x32xf32> to vector<16x32xf32>
    %110 = arith.addf %108, %109 : vector<16x32xf32>
    %111 = arith.addf %14, %110 : vector<16x32xf32>
    %cst_40 = arith.constant dense<0.000000e+00> : vector<32xf32>
    %112 = vector.multi_reduction <add>, %111, %cst_40 [0] : vector<16x32xf32> to vector<32xf32>
    %113 = vector.shape_cast %112 : vector<32xf32> to vector<1x32xf32>
    %cst_41 = arith.constant 1.600000e+01 : f32
    %114 = vector.broadcast %cst_41 : f32 to vector<1x32xf32>
    %115 = arith.divf %113, %114 : vector<1x32xf32>
    %116 = arith.mulf %111, %111 : vector<16x32xf32>
    %cst_42 = arith.constant dense<0.000000e+00> : vector<32xf32>
    %117 = vector.multi_reduction <add>, %116, %cst_42 [0] : vector<16x32xf32> to vector<32xf32>
    %118 = vector.shape_cast %117 : vector<32xf32> to vector<1x32xf32>
    %cst_43 = arith.constant 1.600000e+01 : f32
    %119 = vector.broadcast %cst_43 : f32 to vector<1x32xf32>
    %120 = arith.divf %118, %119 : vector<1x32xf32>
    %121 = arith.mulf %115, %115 : vector<1x32xf32>
    %122 = arith.subf %120, %121 : vector<1x32xf32>
    %123 = vector.broadcast %115 : vector<1x32xf32> to vector<16x32xf32>
    %124 = arith.subf %111, %123 : vector<16x32xf32>
    %cst_44 = arith.constant 9.99999974E-6 : f32
    %125 = vector.broadcast %cst_44 : f32 to vector<1x32xf32>
    %126 = arith.addf %122, %125 : vector<1x32xf32>
    %127 = math.rsqrt %126 : vector<1x32xf32>
    %128 = vector.broadcast %127 : vector<1x32xf32> to vector<16x32xf32>
    %129 = arith.mulf %124, %128 : vector<16x32xf32>
    %130 = vector.broadcast %8 : vector<1x32xf32> to vector<16x32xf32>
    %131 = arith.mulf %129, %130 : vector<16x32xf32>
    %132 = vector.broadcast %9 : vector<1x32xf32> to vector<16x32xf32>
    %133 = arith.addf %131, %132 : vector<16x32xf32>
    %134 = arith.truncf %133 : vector<16x32xf32> to vector<16x32xbf16>
    %cst_45 = arith.constant dense<0.000000e+00> : vector<16x128xf32>
    %135 = tpu.matmul %134, %2, %cst_45 {dimension_numbers = #tpu.dot_dimension_numbers<[1], [0], [0], [1], [0, 0, 1, 1], [], []>} : vector<16x32xbf16>, vector<32x128xbf16>, vector<16x128xf32> -> vector<16x128xf32>
    %136 = vector.broadcast %5 : vector<1x128xf32> to vector<16x128xf32>
    %137 = arith.addf %135, %136 : vector<16x128xf32>
    %cst_46 = arith.constant 5.000000e-01 : f32
    %138 = vector.broadcast %cst_46 : f32 to vector<16x128xf32>
    %139 = arith.mulf %138, %137 : vector<16x128xf32>
    %cst_47 = arith.constant 0.707106769 : f32
    %140 = vector.broadcast %cst_47 : f32 to vector<16x128xf32>
    %141 = arith.mulf %137, %140 : vector<16x128xf32>
    %cst_48 = arith.constant 0.000000e+00 : f32
    %142 = vector.broadcast %cst_48 : f32 to vector<16x128xf32>
    %143 = arith.cmpf oge, %141, %142 : vector<16x128xf32>
    %cst_49 = arith.constant 1.000000e+00 : f32
    %cst_50 = arith.constant -1.000000e+00 : f32
    %144 = vector.broadcast %cst_49 : f32 to vector<16x128xf32>
    %145 = vector.broadcast %cst_50 : f32 to vector<16x128xf32>
    %146 = arith.select %143, %144, %145 : vector<16x128xi1>, vector<16x128xf32>
    %147 = math.absf %141 : vector<16x128xf32>
    %cst_51 = arith.constant 0.327591091 : f32
    %148 = vector.broadcast %cst_51 : f32 to vector<16x128xf32>
    %149 = arith.mulf %148, %147 : vector<16x128xf32>
    %cst_52 = arith.constant 1.000000e+00 : f32
    %150 = vector.broadcast %cst_52 : f32 to vector<16x128xf32>
    %151 = arith.addf %150, %149 : vector<16x128xf32>
    %cst_53 = arith.constant 1.000000e+00 : f32
    %152 = vector.broadcast %cst_53 : f32 to vector<16x128xf32>
    %153 = arith.divf %152, %151 : vector<16x128xf32>
    %cst_54 = arith.constant 1.06140542 : f32
    %154 = vector.broadcast %cst_54 : f32 to vector<16x128xf32>
    %155 = arith.mulf %154, %153 : vector<16x128xf32>
    %cst_55 = arith.constant -1.45315206 : f32
    %156 = vector.broadcast %cst_55 : f32 to vector<16x128xf32>
    %157 = arith.addf %155, %156 : vector<16x128xf32>
    %158 = arith.mulf %157, %153 : vector<16x128xf32>
    %cst_56 = arith.constant 1.42141378 : f32
    %159 = vector.broadcast %cst_56 : f32 to vector<16x128xf32>
    %160 = arith.addf %158, %159 : vector<16x128xf32>
    %161 = arith.mulf %160, %153 : vector<16x128xf32>
    %cst_57 = arith.constant -0.284496725 : f32
    %162 = vector.broadcast %cst_57 : f32 to vector<16x128xf32>
    %163 = arith.addf %161, %162 : vector<16x128xf32>
    %164 = arith.mulf %163, %153 : vector<16x128xf32>
    %cst_58 = arith.constant 0.254829586 : f32
    %165 = vector.broadcast %cst_58 : f32 to vector<16x128xf32>
    %166 = arith.addf %164, %165 : vector<16x128xf32>
    %167 = arith.mulf %166, %153 : vector<16x128xf32>
    %cst_59 = arith.constant 0.000000e+00 : f32
    %168 = vector.broadcast %cst_59 : f32 to vector<16x128xf32>
    %169 = arith.subf %168, %147 : vector<16x128xf32>
    %170 = arith.mulf %169, %147 : vector<16x128xf32>
    %171 = math.exp %170 : vector<16x128xf32>
    %172 = arith.mulf %167, %171 : vector<16x128xf32>
    %cst_60 = arith.constant 1.000000e+00 : f32
    %173 = vector.broadcast %cst_60 : f32 to vector<16x128xf32>
    %174 = arith.subf %173, %172 : vector<16x128xf32>
    %175 = arith.mulf %146, %174 : vector<16x128xf32>
    %cst_61 = arith.constant 1.000000e+00 : f32
    %176 = vector.broadcast %cst_61 : f32 to vector<16x128xf32>
    %177 = arith.addf %176, %175 : vector<16x128xf32>
    %178 = arith.mulf %139, %177 : vector<16x128xf32>
    %179 = arith.truncf %178 : vector<16x128xf32> to vector<16x128xbf16>
    %cst_62 = arith.constant dense<0.000000e+00> : vector<16x32xf32>
    %180 = tpu.matmul %179, %3, %cst_62 {dimension_numbers = #tpu.dot_dimension_numbers<[1], [0], [0], [1], [0, 0, 1, 1], [], []>} : vector<16x128xbf16>, vector<128x32xbf16>, vector<16x32xf32> -> vector<16x32xf32>
    %181 = vector.broadcast %7 : vector<1x32xf32> to vector<16x32xf32>
    %182 = arith.addf %180, %181 : vector<16x32xf32>
    %183 = arith.addf %133, %182 : vector<16x32xf32>
    %cst_63 = arith.constant dense<0.000000e+00> : vector<32xf32>
    %184 = vector.multi_reduction <add>, %183, %cst_63 [0] : vector<16x32xf32> to vector<32xf32>
    %185 = vector.shape_cast %184 : vector<32xf32> to vector<1x32xf32>
    %cst_64 = arith.constant 1.600000e+01 : f32
    %186 = vector.broadcast %cst_64 : f32 to vector<1x32xf32>
    %187 = arith.divf %185, %186 : vector<1x32xf32>
    %188 = arith.mulf %183, %183 : vector<16x32xf32>
    %cst_65 = arith.constant dense<0.000000e+00> : vector<32xf32>
    %189 = vector.multi_reduction <add>, %188, %cst_65 [0] : vector<16x32xf32> to vector<32xf32>
    %190 = vector.shape_cast %189 : vector<32xf32> to vector<1x32xf32>
    %cst_66 = arith.constant 1.600000e+01 : f32
    %191 = vector.broadcast %cst_66 : f32 to vector<1x32xf32>
    %192 = arith.divf %190, %191 : vector<1x32xf32>
    %193 = arith.mulf %187, %187 : vector<1x32xf32>
    %194 = arith.subf %192, %193 : vector<1x32xf32>
    %195 = vector.broadcast %187 : vector<1x32xf32> to vector<16x32xf32>
    %196 = arith.subf %183, %195 : vector<16x32xf32>
    %cst_67 = arith.constant 9.99999974E-6 : f32
    %197 = vector.broadcast %cst_67 : f32 to vector<1x32xf32>
    %198 = arith.addf %194, %197 : vector<1x32xf32>
    %199 = math.rsqrt %198 : vector<1x32xf32>
    %200 = vector.broadcast %199 : vector<1x32xf32> to vector<16x32xf32>
    %201 = arith.mulf %196, %200 : vector<16x32xf32>
    %202 = vector.broadcast %10 : vector<1x32xf32> to vector<16x32xf32>
    %203 = arith.mulf %201, %202 : vector<16x32xf32>
    %204 = vector.broadcast %11 : vector<1x32xf32> to vector<16x32xf32>
    %205 = arith.addf %203, %204 : vector<16x32xf32>
    %c0_68 = arith.constant 0 : index
    %c0_69 = arith.constant 0 : index
    %206 = vector.load %arg3[%c0_68, %c0_69] : memref<16x32xf32, #tpu.memory_space<vmem>>, vector<16x32xf32>
    tpu.vector_store %arg3[%c0_68, %c0_69], %205 {strides = array<i32>} : memref<16x32xf32, #tpu.memory_space<vmem>>, vector<16x32xf32>,
    return
  }
}

</mosaic_0001>

<llo_original>
// kernel: encoder_mtsc_forward.1
$region0: #{encoder_mtsc_forward.1}
  #allocation0 [shape = 'u32[]', space=smem, size = 0x4, offset = 0x4, fixed_abs, tag = 'smem constant byte address 0x4 - core index']
  #allocation1 [shape = 'u32[144,128]{1,0:T(1,128)}', space=vmem, size = 0x12000, scoped, tag = 'internal scratch']
  %s0 = inlined_call_operand.hbm [shape: f32[16,32], index: 0, kind: input, shape index: {}]
  %s1 = inlined_call_operand.hbm [shape: bf16[224,128], index: 1, kind: input, shape index: {}]
  %s2 = inlined_call_operand.hbm [shape: f32[40,128], index: 2, kind: input, shape index: {}]
  %s3 = inlined_call_operand.hbm [shape: f32[16,32], index: 3, kind: output, shape index: {}]
  %s4 = sld [smem:[#allocation0]]
  $region34: #{encoder_mtsc_forward.1} parent=0
    _
  %s6 = ssub.s32 1, %s4
  %s7 = scalar_select 0, %s6, %s4
  $region1: #{encoder_mtsc_forward.1} parent=0
    #allocation2 [shape = 'u8[8192]{0}', space=vmem, size = 0x2000, scoped, tag = 'input window, operand 0, single buffered']
    #allocation3 [shape = 's32[1]{0}', space=sflag, size = 0x4, scoped, tag = 'scoped memory for encoder_mtsc_forward.1']
    #allocation4 [shape = 's32[1]{0}', space=sflag, size = 0x4, scoped, tag = 'scoped memory for encoder_mtsc_forward.1']
    #allocation5 [shape = 'u8[57344]{0}', space=vmem, size = 0xe000, scoped, tag = 'input window, operand 1, single buffered']
    #allocation6 [shape = 's32[1]{0}', space=sflag, size = 0x4, scoped, tag = 'scoped memory for encoder_mtsc_forward.1']
    #allocation7 [shape = 'u8[20480]{0}', space=vmem, size = 0x5000, scoped, tag = 'input window, operand 2, single buffered']
    #allocation8 [shape = 'u8[8192]{0}', space=vmem, size = 0x2000, scoped, tag = 'output window, operand 0, single buffered']
    %8 = vsyncpa [#allocation3], 0
    %9 = vsyncpa [#allocation6], 0
    %10 = vsyncpa [#allocation4], 0
    // Predicated region
    $region2: #{encoder_mtsc_forward.1} parent=1 // pred_check
      _
    $region3: #{encoder_mtsc_forward.1} parent=1 // pred_check_branch
      %12 = sbr.rel (0) target = $region5
    $region4: #{encoder_mtsc_forward.1} parent=1 // pred_region
      %s14 = ssub.s32 256, 256
      %15 = vsyncadd [#allocation3], %s14
      %s16 = sshll.u32 [#allocation2], 4
      %s17 = int_to_ptr.vmem [resolvable:$true] %s16
      %22 = dma.hbm_to_vmem [thread:$0]  %s0, 256, %s17, [#allocation3], 128, 128, 8
    $region5: #{encoder_mtsc_forward.1} parent=1 // pred_fallthru
      _
    // Predicated region
    $region6: #{encoder_mtsc_forward.1} parent=1 // pred_check
      _
    $region7: #{encoder_mtsc_forward.1} parent=1 // pred_check_branch
      %24 = sbr.rel (0) target = $region9
    $region8: #{encoder_mtsc_forward.1} parent=1 // pred_region
      %s26 = ssub.s32 1792, 1792
      %27 = vsyncadd [#allocation6], %s26
      %s28 = sshll.u32 [#allocation5], 4
      %s29 = int_to_ptr.vmem [resolvable:$true] %s28
      %34 = dma.hbm_to_vmem [thread:$0]  %s1, 1792, %s29, [#allocation6], 64, 64, 4
    $region9: #{encoder_mtsc_forward.1} parent=1 // pred_fallthru
      _
    // Predicated region
    $region10: #{encoder_mtsc_forward.1} parent=1 // pred_check
      _
    $region11: #{encoder_mtsc_forward.1} parent=1 // pred_check_branch
      %36 = sbr.rel (0) target = $region13
    $region12: #{encoder_mtsc_forward.1} parent=1 // pred_region
      %s38 = ssub.s32 640, 640
      %39 = vsyncadd [#allocation6], %s38
      %s40 = sshll.u32 [#allocation7], 4
      %s41 = int_to_ptr.vmem [resolvable:$true] %s40
      %46 = dma.hbm_to_vmem [thread:$0]  %s2, 640, %s41, [#allocation6], 128, 128, 8
    $region13: #{encoder_mtsc_forward.1} parent=1 // pred_fallthru
      _
    // Predicated region
    $region14: #{encoder_mtsc_forward.1} parent=1 // pred_check
      _
    $region15: #{encoder_mtsc_forward.1} parent=1 // pred_check_branch
      %48 = sbr.rel (0) target = $region17
    $region16: #{encoder_mtsc_forward.1} parent=1 // pred_region
      %49 = dma.done [#allocation3], 256
    $region17: #{encoder_mtsc_forward.1} parent=1 // pred_fallthru
      _
    // Predicated region
    $region18: #{encoder_mtsc_forward.1} parent=1 // pred_check
      _
    $region19: #{encoder_mtsc_forward.1} parent=1 // pred_check_branch
      %51 = sbr.rel (0) target = $region21
    $region20: #{encoder_mtsc_forward.1} parent=1 // pred_region
      %52 = dma.done [#allocation6], 1792
    $region21: #{encoder_mtsc_forward.1} parent=1 // pred_fallthru
      _
    // Predicated region
    $region22: #{encoder_mtsc_forward.1} parent=1 // pred_check
      _
    $region23: #{encoder_mtsc_forward.1} parent=1 // pred_check_branch
      %54 = sbr.rel (0) target = $region25
    $region24: #{encoder_mtsc_forward.1} parent=1 // pred_region
      %55 = dma.done [#allocation6], 640
    $region25: #{encoder_mtsc_forward.1} parent=1 // pred_fallthru
      _
    %v57 = vld [vmem:[#allocation5] sm:$0xf]
    %v58 = vld [vmem:[#allocation5 + $0x4] sm:$0xf]
    %v59 = vld [vmem:[#allocation5 + $0x8] sm:$0xf]
    %v60 = vld [vmem:[#allocation5 + $0xc] sm:$0xf]
    %v61 = vld [vmem:[#allocation5 + $0x10] sm:$0xf]
    %v62 = vld [vmem:[#allocation5 + $0x14] sm:$0xf]
    %v63 = vld [vmem:[#allocation5 + $0x18] sm:$0xf]
    %v64 = vld [vmem:[#allocation5 + $0x1c] sm:$0xf]
    %v65 = vld [vmem:[#allocation5 + $0x20] sm:$0xf]
    %v66 = vld [vmem:[#allocation5 + $0x24] sm:$0xf]
    %v67 = vld [vmem:[#allocation5 + $0x28] sm:$0xf]
    %v68 = vld [vmem:[#allocation5 + $0x2c] sm:$0xf]
    %v69 = vld [vmem:[#allocation5 + $0x30] sm:$0xf]
    %v70 = vld [vmem:[#allocation5 + $0x34] sm:$0xf]
    %v71 = vld [vmem:[#allocation5 + $0x38] sm:$0xf]
    %v72 = vld [vmem:[#allocation5 + $0x3c] sm:$0xf]
    %v73 = vld [vmem:[#allocation5 + $0x40] sm:$0xf]
    %v74 = vld [vmem:[#allocation5 + $0x44] sm:$0xf]
    %v75 = vld [vmem:[#allocation5 + $0x48] sm:$0xf]
    %v76 = vld [vmem:[#allocation5 + $0x4c] sm:$0xf]
    %v77 = vld [vmem:[#allocation5 + $0x50] sm:$0xf]
    %v78 = vld [vmem:[#allocation5 + $0x54] sm:$0xf]
    %v79 = vld [vmem:[#allocation5 + $0x58] sm:$0xf]
    %v80 = vld [vmem:[#allocation5 + $0x5c] sm:$0xf]
    %v81 = vld [vmem:[#allocation5 + $0x60] sm:$0xf]
    %v82 = vld [vmem:[#allocation5 + $0x64] sm:$0xf]
    %v83 = vld [vmem:[#allocation5 + $0x68] sm:$0xf]
    %v84 = vld [vmem:[#allocation5 + $0x6c] sm:$0xf]
    %v85 = vld [vmem:[#allocation7] sm:$0x1]
    %v86 = vld [vmem:[#allocation7 + $0x1] sm:$0x1]
    %v87 = vld [vmem:[#allocation7 + $0x2] sm:$0x1]
    %v88 = vld [vmem:[#allocation7 + $0x3] sm:$0x1]
    %v89 = vld [vmem:[#allocation7 + $0x4] sm:$0x1]
    %v90 = vld [vmem:[#allocation7 + $0x5] sm:$0x1]
    %v91 = vld [vmem:[#allocation7 + $0x6] sm:$0x1]
    %v92 = vld [vmem:[#allocation7 + $0x7] sm:$0x1]
    %v93 = vld [vmem:[#allocation7 + $0x8] sm:$0xff]
    %v94 = vld [vmem:[#allocation7 + $0x10] sm:$0xff]
    %v95 = vld [vmem:[#allocation7 + $0x18] sm:$0xff]
    %v96 = vld [vmem:[#allocation7 + $0x20] sm:$0xff]
    %v97 = vld [vmem:[#allocation2] sm:$0xff]
    %v98 = vld [vmem:[#allocation2 + $0x8] sm:$0xff]
    %v99 = vpack.c.bf16 %v98, %v97
    %v100 = vlaneseq
    %v101 = vshrl.u32 %v100, 7
    %v102 = vsub.s32 0, %v101
    %v103 = vrot.slane %v85, %v102
    %v108 = vunpack.c.l.b16 %v57
    %v109 = vunpack.c.l.b16 %v58
    %v110 = vunpack.c.l.b16 %v59
    %v111 = vunpack.c.l.b16 %v60
    %v112 = vpack.c.b16 %v109, %v108
    %v113 = vpack.c.b16 %v111, %v110
    %vm116 = vcmask 261120
    %v118 = vsel %vm116, %v99, 0
    %120 = vmatprep.subr.bf16.mxu0 0
    %121 = vmatpush1.bf16.msra.mxu0 0
    %122 = vmatprep.subr.bf16.mxu0 0
    %123 = vmatpush1.bf16.msra.mxu0 0
    %124 = vmatprep.subr.bf16.mxu0 0
    %125 = vmatpush1.bf16.msra.mxu0 0
    %126 = vmatprep.subr.bf16.mxu0 0
    %127 = vmatpush1.bf16.msra.mxu0 0
    %128 = vmatprep.subr.bf16.mxu0 0
    %129 = vmatpush1.bf16.msra.mxu0 0
    %130 = vmatprep.subr.bf16.mxu0 0
    %131 = vmatpush1.bf16.msra.mxu0 0
    %132 = vmatprep.subr.bf16.mxu0 0
    %133 = vmatpush1.bf16.msra.mxu0 %v113
    %134 = vmatprep.subr.bf16.mxu0 0
    %135 = vmatpush1.bf16.msra.mxu0 %v112
    %136 = vmatprep.subr.bf16.mxu0 0
    %137 = vmatpush2.bf16.msra.mxu0 0
    %138 = vmatprep.subr.bf16.mxu0 0
    %139 = vmatpush2.bf16.msra.mxu0 0
    %140 = vmatprep.subr.bf16.mxu0 0
    %141 = vmatpush2.bf16.msra.mxu0 0
    %142 = vmatprep.subr.bf16.mxu0 0
    %143 = vmatpush2.bf16.msra.mxu0 0
    %144 = vmatprep.subr.bf16.mxu0 0
    %145 = vmatpush2.bf16.msra.mxu0 0
    %146 = vmatprep.subr.bf16.mxu0 0
    %147 = vmatpush2.bf16.msra.mxu0 0
    %148 = vmatprep.subr.bf16.mxu0 0
    %149 = vmatpush2.bf16.msra.mxu0 0
    %150 = vmatprep.subr.bf16.mxu0 0
    %151 = vmatpush2.bf16.msra.mxu0 0
    %152 = vmatprep.mubr.bf16.mxu0 0
    %153 = vmatmul.mubr.bf16.gmra.mxu0 %v118
    %v154 = vpop.f32.mrf.mxu0
    %v155 = vadd.f32 %v103, %v154
    %v156 = vpop.f32.mrf.mxu0
    %v157 = vpop.f32.mrf.mxu0
    %v158 = vadd.f32 %v103, %v157
    %v159 = vpop.f32.mrf.mxu0
    %160 = vdwg.mxu0
    %vm161 = vcmask 130048
    %v163 = vsel %vm161, %v93, 0
    %v166 = vsel %vm161, %v94, 0
    %168 = vmatprep.subr.mxu0 0.0
    %169 = vmatpush1.msra.mxu0 0.0
    %170 = vmatprep.subr.mxu0 0.0
    %171 = vmatpush1.msra.mxu0 0.0
    %172 = vmatprep.subr.mxu0 0.0
    %173 = vmatpush1.msra.mxu0 0.0
    %174 = vmatprep.subr.mxu0 0.0
    %175 = vmatpush1.msra.mxu0 0.0
    %176 = vmatprep.subr.mxu0 0.0
    %177 = vmatpush1.msra.mxu0 0.0
    %178 = vmatprep.subr.mxu0 0.0
    %179 = vmatpush1.msra.mxu0 0.0
    %180 = vmatprep.subr.mxu0 0.0
    %181 = vmatpush1.msra.mxu0 0.0
    %182 = vmatprep.subr.mxu0 0.0
    %183 = vmatpush1.msra.mxu0 0.0
    %184 = vmatprep.subr.mxu0 0.0
    %185 = vmatpush1.msra.mxu0 0.0
    %186 = vmatprep.subr.mxu0 0.0
    %187 = vmatpush1.msra.mxu0 0.0
    %188 = vmatprep.subr.mxu0 0.0
    %189 = vmatpush1.msra.mxu0 0.0
    %190 = vmatprep.subr.mxu0 0.0
    %191 = vmatpush1.msra.mxu0 0.0
    %192 = vmatprep.subr.mxu0 0.0
    %193 = vmatpush1.msra.mxu0 0.0
    %194 = vmatprep.subr.mxu0 0.0
    %195 = vmatpush1.msra.mxu0 0.0
    %196 = vmatprep.subr.mxu0 0.0
    %197 = vmatpush1.msra.mxu0 %v158
    %198 = vmatprep.subr.mxu0 0.0
    %199 = vmatpush1.msra.mxu0 %v155
    %200 = vmatprep.subr.mxu0 0.0
    %201 = vmatpush2.msra.mxu0 0.0
    %202 = vmatprep.subr.mxu0 0.0
    %203 = vmatpush2.msra.mxu0 0.0
    %204 = vmatprep.subr.mxu0 0.0
    %205 = vmatpush2.msra.mxu0 0.0
    %206 = vmatprep.subr.mxu0 0.0
    %207 = vmatpush2.msra.mxu0 0.0
    %208 = vmatprep.subr.mxu0 0.0
    %209 = vmatpush2.msra.mxu0 0.0
    %210 = vmatprep.subr.mxu0 0.0
    %211 = vmatpush2.msra.mxu0 0.0
    %212 = vmatprep.subr.mxu0 0.0
    %213 = vmatpush2.msra.mxu0 0.0
    %214 = vmatprep.subr.mxu0 0.0
    %215 = vmatpush2.msra.mxu0 0.0
    %216 = vmatprep.subr.mxu0 0.0
    %217 = vmatpush2.msra.mxu0 0.0
    %218 = vmatprep.subr.mxu0 0.0
    %219 = vmatpush2.msra.mxu0 0.0
    %220 = vmatprep.subr.mxu0 0.0
    %221 = vmatpush2.msra.mxu0 0.0
    %222 = vmatprep.subr.mxu0 0.0
    %223 = vmatpush2.msra.mxu0 0.0
    %224 = vmatprep.subr.mxu0 0.0
    %225 = vmatpush2.msra.mxu0 0.0
    %226 = vmatprep.subr.mxu0 0.0
    %227 = vmatpush2.msra.mxu0 0.0
    %228 = vmatprep.subr.mxu0 0.0
    %229 = vmatpush2.msra.mxu0 0.0
    %230 = vmatprep.subr.mxu0 0.0
    %231 = vmatpush2.msra.mxu0 0.0
    %232 = vmatprep.mubr.f32.mxu0 0.0
    %233 = vmatmul.mubr.f32.gmra.mxu0 %v163
    %v234 = vpop.f32.mrf.mxu0
    %v235 = vadd.f32 0.0, %v234
    %v236 = vpop.f32.mrf.mxu0
    %237 = vmatprep.mubr.f32.mxu0 0.0
    %238 = vmatmul.mubr.f32.gmra.mxu0 %v166
    %v239 = vpop.f32.mrf.mxu0
    %v240 = vadd.f32 0.0, %v239
    %v241 = vpop.f32.mrf.mxu0
    %242 = vdwg.mxu0
    %v243 = vpack.c.bf16 %v235, %v235
    %v244 = vpack.c.bf16 %v240, %v240
    %246 = vrot.lane.b32.xlu0 %v243, 96
    %v247 = vpop.permute.xlu0 %246
    %vm248 = vcmask 64512
    %v250 = vsel %vm248, %v243, 0
    %v253 = vsel %vm248, %v247, 0
    %255 = vmatprep.subr.bf16.mxu0 0
    %256 = vmatpush1.bf16.xpose.msra.mxu0 0
    %257 = vmatprep.subr.bf16.mxu0 0
    %258 = vmatpush1.bf16.xpose.msra.mxu0 0
    %259 = vmatprep.subr.bf16.mxu0 0
    %260 = vmatpush1.bf16.xpose.msra.mxu0 0
    %261 = vmatprep.subr.bf16.mxu0 0
    %262 = vmatpush1.bf16.xpose.msra.mxu0 0
    %263 = vmatprep.subr.bf16.mxu0 0
    %264 = vmatpush1.bf16.xpose.msra.mxu0 0
    %265 = vmatprep.subr.bf16.mxu0 0
    %266 = vmatpush1.bf16.xpose.msra.mxu0 0
    %267 = vmatprep.subr.bf16.mxu0 0
    %268 = vmatpush1.bf16.xpose.msra.mxu0 0
    %269 = vmatprep.subr.bf16.mxu0 0
    %270 = vmatpush1.bf16.xpose.msra.mxu0 %v253
    %271 = vmatprep.subr.bf16.mxu0 0
    %272 = vmatpush2.bf16.xpose.msra.mxu0 0
    %273 = vmatprep.subr.bf16.mxu0 0
    %274 = vmatpush2.bf16.xpose.msra.mxu0 0
    %275 = vmatprep.subr.bf16.mxu0 0
    %276 = vmatpush2.bf16.xpose.msra.mxu0 0
    %277 = vmatprep.subr.bf16.mxu0 0
    %278 = vmatpush2.bf16.xpose.msra.mxu0 0
    %279 = vmatprep.subr.bf16.mxu0 0
    %280 = vmatpush2.bf16.xpose.msra.mxu0 0
    %281 = vmatprep.subr.bf16.mxu0 0
    %282 = vmatpush2.bf16.xpose.msra.mxu0 0
    %283 = vmatprep.subr.bf16.mxu0 0
    %284 = vmatpush2.bf16.xpose.msra.mxu0 0
    %285 = vmatprep.subr.bf16.mxu0 0
    %286 = vmatpush2.bf16.xpose.msra.mxu0 0
    %287 = vmatprep.mubr.bf16.mxu0 0
    %288 = vmatmul.mubr.bf16.gmra.mxu0 %v250
    %v289 = vpop.f32.mrf.mxu0
    %v290 = vadd.f32 0.0, %v289
    %v291 = vpop.f32.mrf.mxu0
    %v292 = vpop.f32.mrf.mxu0
    %v293 = vpop.f32.mrf.mxu0
    %294 = vdwg.mxu0
    %296 = vrot.lane.b32.xlu0 %v244, 96
    %v297 = vpop.permute.xlu0 %296
    %v299 = vsel %vm248, %v244, 0
    %v302 = vsel %vm248, %v297, 0
    %304 = vmatprep.subr.bf16.mxu0 0
    %305 = vmatpush1.bf16.xpose.msra.mxu0 0
    %306 = vmatprep.subr.bf16.mxu0 0
    %307 = vmatpush1.bf16.xpose.msra.mxu0 0
    %308 = vmatprep.subr.bf16.mxu0 0
    %309 = vmatpush1.bf16.xpose.msra.mxu0 0
    %310 = vmatprep.subr.bf16.mxu0 0
    %311 = vmatpush1.bf16.xpose.msra.mxu0 0
    %312 = vmatprep.subr.bf16.mxu0 0
    %313 = vmatpush1.bf16.xpose.msra.mxu0 0
    %314 = vmatprep.subr.bf16.mxu0 0
    %315 = vmatpush1.bf16.xpose.msra.mxu0 0
    %316 = vmatprep.subr.bf16.mxu0 0
    %317 = vmatpush1.bf16.xpose.msra.mxu0 0
    %318 = vmatprep.subr.bf16.mxu0 0
    %319 = vmatpush1.bf16.xpose.msra.mxu0 %v302
    %320 = vmatprep.subr.bf16.mxu0 0
    %321 = vmatpush2.bf16.xpose.msra.mxu0 0
    %322 = vmatprep.subr.bf16.mxu0 0
    %323 = vmatpush2.bf16.xpose.msra.mxu0 0
    %324 = vmatprep.subr.bf16.mxu0 0
    %325 = vmatpush2.bf16.xpose.msra.mxu0 0
    %326 = vmatprep.subr.bf16.mxu0 0
    %327 = vmatpush2.bf16.xpose.msra.mxu0 0
    %328 = vmatprep.subr.bf16.mxu0 0
    %329 = vmatpush2.bf16.xpose.msra.mxu0 0
    %330 = vmatprep.subr.bf16.mxu0 0
    %331 = vmatpush2.bf16.xpose.msra.mxu0 0
    %332 = vmatprep.subr.bf16.mxu0 0
    %333 = vmatpush2.bf16.xpose.msra.mxu0 0
    %334 = vmatprep.subr.bf16.mxu0 0
    %335 = vmatpush2.bf16.xpose.msra.mxu0 0
    %336 = vmatprep.mubr.bf16.mxu0 0
    %337 = vmatmul.mubr.bf16.gmra.mxu0 %v299
    %v338 = vpop.f32.mrf.mxu0
    %v339 = vadd.f32 0.0, %v338
    %v340 = vpop.f32.mrf.mxu0
    %v341 = vpop.f32.mrf.mxu0
    %v342 = vpop.f32.mrf.mxu0
    %343 = vdwg.mxu0
    %v344 = vmul.f32 %v290, 0.35355338
    %v345 = vmul.f32 %v339, 0.35355338
    %v346 = vsel %vm248, %v344, -inf
    %347 = vmax.xlane.f32.xlu0 %v346
    %v348 = vpop.xlane.xlu0 %347
    %v349 = vsel %vm248, %v345, -inf
    %350 = vmax.xlane.f32.xlu0 %v349
    %v351 = vpop.xlane.xlu0 %350
    %v352 = vsub.f32 %v344, %v348
    %v353 = vsub.f32 %v345, %v351
    %v354 = vmul.f32 %v352, 1.442695
    %v355 = vpow.pop %v354
    %v356 = vmul.f32 %v353, 1.442695
    %v357 = vpow.pop %v356
    %v358 = vsel %vm248, %v355, 0.0
    %359 = vadd.xlane.f32.xlu0 %v358
    %v360 = vpop.xlane.xlu0 %359
    %v361 = vsel %vm248, %v357, 0.0
    %362 = vadd.xlane.f32.xlu0 %v361
    %v363 = vpop.xlane.xlu0 %362
    %v364 = vrcp.pop %v360
    %v365 = vrcp.pop %v363
    %v366 = vmul.f32 %v355, %v364
    %v367 = vmul.f32 %v357, %v365
    %v368 = vpack.c.bf16 %v366, %v366
    %v369 = vpack.c.bf16 %v367, %v367
    %370 = vrot.lane.b32.xlu0 %v243, 64
    %v371 = vpop.permute.xlu0 %370
    %v373 = vsel %vm248, %v368, 0
    %vm375 = vcmask 1043456
    %v377 = vsel %vm375, %v371, 0
    %379 = vmatprep.subr.bf16.mxu0 0
    %380 = vmatpush1.bf16.msra.mxu0 0
    %381 = vmatprep.subr.bf16.mxu0 0
    %382 = vmatpush1.bf16.msra.mxu0 0
    %383 = vmatprep.subr.bf16.mxu0 0
    %384 = vmatpush1.bf16.msra.mxu0 0
    %385 = vmatprep.subr.bf16.mxu0 0
    %386 = vmatpush1.bf16.msra.mxu0 0
    %387 = vmatprep.subr.bf16.mxu0 0
    %388 = vmatpush1.bf16.msra.mxu0 0
    %389 = vmatprep.subr.bf16.mxu0 0
    %390 = vmatpush1.bf16.msra.mxu0 0
    %391 = vmatprep.subr.bf16.mxu0 0
    %392 = vmatpush1.bf16.msra.mxu0 0
    %393 = vmatprep.subr.bf16.mxu0 0
    %394 = vmatpush1.bf16.msra.mxu0 %v377
    %395 = vmatprep.subr.bf16.mxu0 0
    %396 = vmatpush2.bf16.msra.mxu0 0
    %397 = vmatprep.subr.bf16.mxu0 0
    %398 = vmatpush2.bf16.msra.mxu0 0
    %399 = vmatprep.subr.bf16.mxu0 0
    %400 = vmatpush2.bf16.msra.mxu0 0
    %401 = vmatprep.subr.bf16.mxu0 0
    %402 = vmatpush2.bf16.msra.mxu0 0
    %403 = vmatprep.subr.bf16.mxu0 0
    %404 = vmatpush2.bf16.msra.mxu0 0
    %405 = vmatprep.subr.bf16.mxu0 0
    %406 = vmatpush2.bf16.msra.mxu0 0
    %407 = vmatprep.subr.bf16.mxu0 0
    %408 = vmatpush2.bf16.msra.mxu0 0
    %409 = vmatprep.subr.bf16.mxu0 0
    %410 = vmatpush2.bf16.msra.mxu0 0
    %411 = vmatprep.mubr.bf16.mxu0 0
    %412 = vmatmul.mubr.bf16.gmra.mxu0 %v373
    %v413 = vpop.f32.mrf.mxu0
    %v414 = vadd.f32 0.0, %v413
    %v415 = vpop.f32.mrf.mxu0
    %v416 = vpop.f32.mrf.mxu0
    %v417 = vpop.f32.mrf.mxu0
    %418 = vdwg.mxu0
    %419 = vrot.lane.b32.xlu0 %v244, 64
    %v420 = vpop.permute.xlu0 %419
    %v422 = vsel %vm248, %v369, 0
    %v425 = vsel %vm375, %v420, 0
    %427 = vmatprep.subr.bf16.mxu0 0
    %428 = vmatpush1.bf16.msra.mxu0 0
    %429 = vmatprep.subr.bf16.mxu0 0
    %430 = vmatpush1.bf16.msra.mxu0 0
    %431 = vmatprep.subr.bf16.mxu0 0
    %432 = vmatpush1.bf16.msra.mxu0 0
    %433 = vmatprep.subr.bf16.mxu0 0
    %434 = vmatpush1.bf16.msra.mxu0 0
    %435 = vmatprep.subr.bf16.mxu0 0
    %436 = vmatpush1.bf16.msra.mxu0 0
    %437 = vmatprep.subr.bf16.mxu0 0
    %438 = vmatpush1.bf16.msra.mxu0 0
    %439 = vmatprep.subr.bf16.mxu0 0
    %440 = vmatpush1.bf16.msra.mxu0 0
    %441 = vmatprep.subr.bf16.mxu0 0
    %442 = vmatpush1.bf16.msra.mxu0 %v425
    %443 = vmatprep.subr.bf16.mxu0 0
    %444 = vmatpush2.bf16.msra.mxu0 0
    %445 = vmatprep.subr.bf16.mxu0 0
    %446 = vmatpush2.bf16.msra.mxu0 0
    %447 = vmatprep.subr.bf16.mxu0 0
    %448 = vmatpush2.bf16.msra.mxu0 0
    %449 = vmatprep.subr.bf16.mxu0 0
    %450 = vmatpush2.bf16.msra.mxu0 0
    %451 = vmatprep.subr.bf16.mxu0 0
    %452 = vmatpush2.bf16.msra.mxu0 0
    %453 = vmatprep.subr.bf16.mxu0 0
    %454 = vmatpush2.bf16.msra.mxu0 0
    %455 = vmatprep.subr.bf16.mxu0 0
    %456 = vmatpush2.bf16.msra.mxu0 0
    %457 = vmatprep.subr.bf16.mxu0 0
    %458 = vmatpush2.bf16.msra.mxu0 0
    %459 = vmatprep.mubr.bf16.mxu0 0
    %460 = vmatmul.mubr.bf16.gmra.mxu0 %v422
    %v461 = vpop.f32.mrf.mxu0
    %v462 = vadd.f32 0.0, %v461
    %v463 = vpop.f32.mrf.mxu0
    %v464 = vpop.f32.mrf.mxu0
    %v465 = vpop.f32.mrf.mxu0
    %466 = vdwg.mxu0
    %467 = vrot.lane.b32.xlu0 %v243, 120
    %v468 = vpop.permute.xlu0 %467
    %469 = vrot.lane.b32.xlu0 %v243, 88
    %v470 = vpop.permute.xlu0 %469
    %v472 = vsel %vm248, %v468, 0
    %v475 = vsel %vm248, %v470, 0
    %477 = vmatprep.subr.bf16.mxu0 0
    %478 = vmatpush1.bf16.xpose.msra.mxu0 0
    %479 = vmatprep.subr.bf16.mxu0 0
    %480 = vmatpush1.bf16.xpose.msra.mxu0 0
    %481 = vmatprep.subr.bf16.mxu0 0
    %482 = vmatpush1.bf16.xpose.msra.mxu0 0
    %483 = vmatprep.subr.bf16.mxu0 0
    %484 = vmatpush1.bf16.xpose.msra.mxu0 0
    %485 = vmatprep.subr.bf16.mxu0 0
    %486 = vmatpush1.bf16.xpose.msra.mxu0 0
    %487 = vmatprep.subr.bf16.mxu0 0
    %488 = vmatpush1.bf16.xpose.msra.mxu0 0
    %489 = vmatprep.subr.bf16.mxu0 0
    %490 = vmatpush1.bf16.xpose.msra.mxu0 0
    %491 = vmatprep.subr.bf16.mxu0 0
    %492 = vmatpush1.bf16.xpose.msra.mxu0 %v475
    %493 = vmatprep.subr.bf16.mxu0 0
    %494 = vmatpush2.bf16.xpose.msra.mxu0 0
    %495 = vmatprep.subr.bf16.mxu0 0
    %496 = vmatpush2.bf16.xpose.msra.mxu0 0
    %497 = vmatprep.subr.bf16.mxu0 0
    %498 = vmatpush2.bf16.xpose.msra.mxu0 0
    %499 = vmatprep.subr.bf16.mxu0 0
    %500 = vmatpush2.bf16.xpose.msra.mxu0 0
    %501 = vmatprep.subr.bf16.mxu0 0
    %502 = vmatpush2.bf16.xpose.msra.mxu0 0
    %503 = vmatprep.subr.bf16.mxu0 0
    %504 = vmatpush2.bf16.xpose.msra.mxu0 0
    %505 = vmatprep.subr.bf16.mxu0 0
    %506 = vmatpush2.bf16.xpose.msra.mxu0 0
    %507 = vmatprep.subr.bf16.mxu0 0
    %508 = vmatpush2.bf16.xpose.msra.mxu0 0
    %509 = vmatprep.mubr.bf16.mxu0 0
    %510 = vmatmul.mubr.bf16.gmra.mxu0 %v472
    %v511 = vpop.f32.mrf.mxu0
    %v512 = vadd.f32 0.0, %v511
    %v513 = vpop.f32.mrf.mxu0
    %v514 = vpop.f32.mrf.mxu0
    %v515 = vpop.f32.mrf.mxu0
    %516 = vdwg.mxu0
    %517 = vrot.lane.b32.xlu0 %v244, 120
    %v518 = vpop.permute.xlu0 %517
    %519 = vrot.lane.b32.xlu0 %v244, 88
    %v520 = vpop.permute.xlu0 %519
    %v522 = vsel %vm248, %v518, 0
    %v525 = vsel %vm248, %v520, 0
    %527 = vmatprep.subr.bf16.mxu0 0
    %528 = vmatpush1.bf16.xpose.msra.mxu0 0
    %529 = vmatprep.subr.bf16.mxu0 0
    %530 = vmatpush1.bf16.xpose.msra.mxu0 0
    %531 = vmatprep.subr.bf16.mxu0 0
    %532 = vmatpush1.bf16.xpose.msra.mxu0 0
    %533 = vmatprep.subr.bf16.mxu0 0
    %534 = vmatpush1.bf16.xpose.msra.mxu0 0
    %535 = vmatprep.subr.bf16.mxu0 0
    %536 = vmatpush1.bf16.xpose.msra.mxu0 0
    %537 = vmatprep.subr.bf16.mxu0 0
    %538 = vmatpush1.bf16.xpose.msra.mxu0 0
    %539 = vmatprep.subr.bf16.mxu0 0
    %540 = vmatpush1.bf16.xpose.msra.mxu0 0
    %541 = vmatprep.subr.bf16.mxu0 0
    %542 = vmatpush1.bf16.xpose.msra.mxu0 %v525
    %543 = vmatprep.subr.bf16.mxu0 0
    %544 = vmatpush2.bf16.xpose.msra.mxu0 0
    %545 = vmatprep.subr.bf16.mxu0 0
    %546 = vmatpush2.bf16.xpose.msra.mxu0 0
    %547 = vmatprep.subr.bf16.mxu0 0
    %548 = vmatpush2.bf16.xpose.msra.mxu0 0
    %549 = vmatprep.subr.bf16.mxu0 0
    %550 = vmatpush2.bf16.xpose.msra.mxu0 0
    %551 = vmatprep.subr.bf16.mxu0 0
    %552 = vmatpush2.bf16.xpose.msra.mxu0 0
    %553 = vmatprep.subr.bf16.mxu0 0
    %554 = vmatpush2.bf16.xpose.msra.mxu0 0
    %555 = vmatprep.subr.bf16.mxu0 0
    %556 = vmatpush2.bf16.xpose.msra.mxu0 0
    %557 = vmatprep.subr.bf16.mxu0 0
    %558 = vmatpush2.bf16.xpose.msra.mxu0 0
    %559 = vmatprep.mubr.bf16.mxu0 0
    %560 = vmatmul.mubr.bf16.gmra.mxu0 %v522
    %v561 = vpop.f32.mrf.mxu0
    %v562 = vadd.f32 0.0, %v561
    %v563 = vpop.f32.mrf.mxu0
    %v564 = vpop.f32.mrf.mxu0
    %v565 = vpop.f32.mrf.mxu0
    %566 = vdwg.mxu0
    %v567 = vmul.f32 %v512, 0.35355338
    %v568 = vmul.f32 %v562, 0.35355338
    %v569 = vsel %vm248, %v567, -inf
    %570 = vmax.xlane.f32.xlu0 %v569
    %v571 = vpop.xlane.xlu0 %570
    %v572 = vsel %vm248, %v568, -inf
    %573 = vmax.xlane.f32.xlu0 %v572
    %v574 = vpop.xlane.xlu0 %573
    %v575 = vsub.f32 %v567, %v571
    %v576 = vsub.f32 %v568, %v574
    %v577 = vmul.f32 %v575, 1.442695
    %v578 = vpow.pop %v577
    %v579 = vmul.f32 %v576, 1.442695
    %v580 = vpow.pop %v579
    %v581 = vsel %vm248, %v578, 0.0
    %582 = vadd.xlane.f32.xlu0 %v581
    %v583 = vpop.xlane.xlu0 %582
    %v584 = vsel %vm248, %v580, 0.0
    %585 = vadd.xlane.f32.xlu0 %v584
    %v586 = vpop.xlane.xlu0 %585
    %v587 = vrcp.pop %v583
    %v588 = vrcp.pop %v586
    %v589 = vmul.f32 %v578, %v587
    %v590 = vmul.f32 %v580, %v588
    %v591 = vpack.c.bf16 %v589, %v589
    %v592 = vpack.c.bf16 %v590, %v590
    %593 = vrot.lane.b32.xlu0 %v243, 56
    %v594 = vpop.permute.xlu0 %593
    %v596 = vsel %vm248, %v591, 0
    %v599 = vsel %vm375, %v594, 0
    %601 = vmatprep.subr.bf16.mxu0 0
    %602 = vmatpush1.bf16.msra.mxu0 0
    %603 = vmatprep.subr.bf16.mxu0 0
    %604 = vmatpush1.bf16.msra.mxu0 0
    %605 = vmatprep.subr.bf16.mxu0 0
    %606 = vmatpush1.bf16.msra.mxu0 0
    %607 = vmatprep.subr.bf16.mxu0 0
    %608 = vmatpush1.bf16.msra.mxu0 0
    %609 = vmatprep.subr.bf16.mxu0 0
    %610 = vmatpush1.bf16.msra.mxu0 0
    %611 = vmatprep.subr.bf16.mxu0 0
    %612 = vmatpush1.bf16.msra.mxu0 0
    %613 = vmatprep.subr.bf16.mxu0 0
    %614 = vmatpush1.bf16.msra.mxu0 0
    %615 = vmatprep.subr.bf16.mxu0 0
    %616 = vmatpush1.bf16.msra.mxu0 %v599
    %617 = vmatprep.subr.bf16.mxu0 0
    %618 = vmatpush2.bf16.msra.mxu0 0
    %619 = vmatprep.subr.bf16.mxu0 0
    %620 = vmatpush2.bf16.msra.mxu0 0
    %621 = vmatprep.subr.bf16.mxu0 0
    %622 = vmatpush2.bf16.msra.mxu0 0
    %623 = vmatprep.subr.bf16.mxu0 0
    %624 = vmatpush2.bf16.msra.mxu0 0
    %625 = vmatprep.subr.bf16.mxu0 0
    %626 = vmatpush2.bf16.msra.mxu0 0
    %627 = vmatprep.subr.bf16.mxu0 0
    %628 = vmatpush2.bf16.msra.mxu0 0
    %629 = vmatprep.subr.bf16.mxu0 0
    %630 = vmatpush2.bf16.msra.mxu0 0
    %631 = vmatprep.subr.bf16.mxu0 0
    %632 = vmatpush2.bf16.msra.mxu0 0
    %633 = vmatprep.mubr.bf16.mxu0 0
    %634 = vmatmul.mubr.bf16.gmra.mxu0 %v596
    %v635 = vpop.f32.mrf.mxu0
    %v636 = vadd.f32 0.0, %v635
    %v637 = vpop.f32.mrf.mxu0
    %v638 = vpop.f32.mrf.mxu0
    %v639 = vpop.f32.mrf.mxu0
    %640 = vdwg.mxu0
    %641 = vrot.lane.b32.xlu0 %v244, 56
    %v642 = vpop.permute.xlu0 %641
    %v644 = vsel %vm248, %v592, 0
    %v647 = vsel %vm375, %v642, 0
    %649 = vmatprep.subr.bf16.mxu0 0
    %650 = vmatpush1.bf16.msra.mxu0 0
    %651 = vmatprep.subr.bf16.mxu0 0
    %652 = vmatpush1.bf16.msra.mxu0 0
    %653 = vmatprep.subr.bf16.mxu0 0
    %654 = vmatpush1.bf16.msra.mxu0 0
    %655 = vmatprep.subr.bf16.mxu0 0
    %656 = vmatpush1.bf16.msra.mxu0 0
    %657 = vmatprep.subr.bf16.mxu0 0
    %658 = vmatpush1.bf16.msra.mxu0 0
    %659 = vmatprep.subr.bf16.mxu0 0
    %660 = vmatpush1.bf16.msra.mxu0 0
    %661 = vmatprep.subr.bf16.mxu0 0
    %662 = vmatpush1.bf16.msra.mxu0 0
    %663 = vmatprep.subr.bf16.mxu0 0
    %664 = vmatpush1.bf16.msra.mxu0 %v647
    %665 = vmatprep.subr.bf16.mxu0 0
    %666 = vmatpush2.bf16.msra.mxu0 0
    %667 = vmatprep.subr.bf16.mxu0 0
    %668 = vmatpush2.bf16.msra.mxu0 0
    %669 = vmatprep.subr.bf16.mxu0 0
    %670 = vmatpush2.bf16.msra.mxu0 0
    %671 = vmatprep.subr.bf16.mxu0 0
    %672 = vmatpush2.bf16.msra.mxu0 0
    %673 = vmatprep.subr.bf16.mxu0 0
    %674 = vmatpush2.bf16.msra.mxu0 0
    %675 = vmatprep.subr.bf16.mxu0 0
    %676 = vmatpush2.bf16.msra.mxu0 0
    %677 = vmatprep.subr.bf16.mxu0 0
    %678 = vmatpush2.bf16.msra.mxu0 0
    %679 = vmatprep.subr.bf16.mxu0 0
    %680 = vmatpush2.bf16.msra.mxu0 0
    %681 = vmatprep.mubr.bf16.mxu0 0
    %682 = vmatmul.mubr.bf16.gmra.mxu0 %v644
    %v683 = vpop.f32.mrf.mxu0
    %v684 = vadd.f32 0.0, %v683
    %v685 = vpop.f32.mrf.mxu0
    %v686 = vpop.f32.mrf.mxu0
    %v687 = vpop.f32.mrf.mxu0
    %688 = vdwg.mxu0
    %689 = vrot.lane.b32.xlu0 %v243, 112
    %v690 = vpop.permute.xlu0 %689
    %691 = vrot.lane.b32.xlu0 %v243, 80
    %v692 = vpop.permute.xlu0 %691
    %v694 = vsel %vm248, %v690, 0
    %v697 = vsel %vm248, %v692, 0
    %699 = vmatprep.subr.bf16.mxu0 0
    %700 = vmatpush1.bf16.xpose.msra.mxu0 0
    %701 = vmatprep.subr.bf16.mxu0 0
    %702 = vmatpush1.bf16.xpose.msra.mxu0 0
    %703 = vmatprep.subr.bf16.mxu0 0
    %704 = vmatpush1.bf16.xpose.msra.mxu0 0
    %705 = vmatprep.subr.bf16.mxu0 0
    %706 = vmatpush1.bf16.xpose.msra.mxu0 0
    %707 = vmatprep.subr.bf16.mxu0 0
    %708 = vmatpush1.bf16.xpose.msra.mxu0 0
    %709 = vmatprep.subr.bf16.mxu0 0
    %710 = vmatpush1.bf16.xpose.msra.mxu0 0
    %711 = vmatprep.subr.bf16.mxu0 0
    %712 = vmatpush1.bf16.xpose.msra.mxu0 0
    %713 = vmatprep.subr.bf16.mxu0 0
    %714 = vmatpush1.bf16.xpose.msra.mxu0 %v697
    %715 = vmatprep.subr.bf16.mxu0 0
    %716 = vmatpush2.bf16.xpose.msra.mxu0 0
    %717 = vmatprep.subr.bf16.mxu0 0
    %718 = vmatpush2.bf16.xpose.msra.mxu0 0
    %719 = vmatprep.subr.bf16.mxu0 0
    %720 = vmatpush2.bf16.xpose.msra.mxu0 0
    %721 = vmatprep.subr.bf16.mxu0 0
    %722 = vmatpush2.bf16.xpose.msra.mxu0 0
    %723 = vmatprep.subr.bf16.mxu0 0
    %724 = vmatpush2.bf16.xpose.msra.mxu0 0
    %725 = vmatprep.subr.bf16.mxu0 0
    %726 = vmatpush2.bf16.xpose.msra.mxu0 0
    %727 = vmatprep.subr.bf16.mxu0 0
    %728 = vmatpush2.bf16.xpose.msra.mxu0 0
    %729 = vmatprep.subr.bf16.mxu0 0
    %730 = vmatpush2.bf16.xpose.msra.mxu0 0
    %731 = vmatprep.mubr.bf16.mxu0 0
    %732 = vmatmul.mubr.bf16.gmra.mxu0 %v694
    %v733 = vpop.f32.mrf.mxu0
    %v734 = vadd.f32 0.0, %v733
    %v735 = vpop.f32.mrf.mxu0
    %v736 = vpop.f32.mrf.mxu0
    %v737 = vpop.f32.mrf.mxu0
    %738 = vdwg.mxu0
    %739 = vrot.lane.b32.xlu0 %v244, 112
    %v740 = vpop.permute.xlu0 %739
    %741 = vrot.lane.b32.xlu0 %v244, 80
    %v742 = vpop.permute.xlu0 %741
    %v744 = vsel %vm248, %v740, 0
    %v747 = vsel %vm248, %v742, 0
    %749 = vmatprep.subr.bf16.mxu0 0
    %750 = vmatpush1.bf16.xpose.msra.mxu0 0
    %751 = vmatprep.subr.bf16.mxu0 0
    %752 = vmatpush1.bf16.xpose.msra.mxu0 0
    %753 = vmatprep.subr.bf16.mxu0 0
    %754 = vmatpush1.bf16.xpose.msra.mxu0 0
    %755 = vmatprep.subr.bf16.mxu0 0
    %756 = vmatpush1.bf16.xpose.msra.mxu0 0
    %757 = vmatprep.subr.bf16.mxu0 0
    %758 = vmatpush1.bf16.xpose.msra.mxu0 0
    %759 = vmatprep.subr.bf16.mxu0 0
    %760 = vmatpush1.bf16.xpose.msra.mxu0 0
    %761 = vmatprep.subr.bf16.mxu0 0
    %762 = vmatpush1.bf16.xpose.msra.mxu0 0
    %763 = vmatprep.subr.bf16.mxu0 0
    %764 = vmatpush1.bf16.xpose.msra.mxu0 %v747
    %765 = vmatprep.subr.bf16.mxu0 0
    %766 = vmatpush2.bf16.xpose.msra.mxu0 0
    %767 = vmatprep.subr.bf16.mxu0 0
    %768 = vmatpush2.bf16.xpose.msra.mxu0 0
    %769 = vmatprep.subr.bf16.mxu0 0
    %770 = vmatpush2.bf16.xpose.msra.mxu0 0
    %771 = vmatprep.subr.bf16.mxu0 0
    %772 = vmatpush2.bf16.xpose.msra.mxu0 0
    %773 = vmatprep.subr.bf16.mxu0 0
    %774 = vmatpush2.bf16.xpose.msra.mxu0 0
    %775 = vmatprep.subr.bf16.mxu0 0
    %776 = vmatpush2.bf16.xpose.msra.mxu0 0
    %777 = vmatprep.subr.bf16.mxu0 0
    %778 = vmatpush2.bf16.xpose.msra.mxu0 0
    %779 = vmatprep.subr.bf16.mxu0 0
    %780 = vmatpush2.bf16.xpose.msra.mxu0 0
    %781 = vmatprep.mubr.bf16.mxu0 0
    %782 = vmatmul.mubr.bf16.gmra.mxu0 %v744
    %v783 = vpop.f32.mrf.mxu0
    %v784 = vadd.f32 0.0, %v783
    %v785 = vpop.f32.mrf.mxu0
    %v786 = vpop.f32.mrf.mxu0
    %v787 = vpop.f32.mrf.mxu0
    %788 = vdwg.mxu0
    %v789 = vmul.f32 %v734, 0.35355338
    %v790 = vmul.f32 %v784, 0.35355338
    %v791 = vsel %vm248, %v789, -inf
    %792 = vmax.xlane.f32.xlu0 %v791
    %v793 = vpop.xlane.xlu0 %792
    %v794 = vsel %vm248, %v790, -inf
    %795 = vmax.xlane.f32.xlu0 %v794
    %v796 = vpop.xlane.xlu0 %795
    %v797 = vsub.f32 %v789, %v793
    %v798 = vsub.f32 %v790, %v796
    %v799 = vmul.f32 %v797, 1.442695
    %v800 = vpow.pop %v799
    %v801 = vmul.f32 %v798, 1.442695
    %v802 = vpow.pop %v801
    %v803 = vsel %vm248, %v800, 0.0
    %804 = vadd.xlane.f32.xlu0 %v803
    %v805 = vpop.xlane.xlu0 %804
    %v806 = vsel %vm248, %v802, 0.0
    %807 = vadd.xlane.f32.xlu0 %v806
    %v808 = vpop.xlane.xlu0 %807
    %v809 = vrcp.pop %v805
    %v810 = vrcp.pop %v808
    %v811 = vmul.f32 %v800, %v809
    %v812 = vmul.f32 %v802, %v810
    %v813 = vpack.c.bf16 %v811, %v811
    %v814 = vpack.c.bf16 %v812, %v812
    %815 = vrot.lane.b32.xlu0 %v243, 48
    %v816 = vpop.permute.xlu0 %815
    %v818 = vsel %vm248, %v813, 0
    %v821 = vsel %vm375, %v816, 0
    %823 = vmatprep.subr.bf16.mxu0 0
    %824 = vmatpush1.bf16.msra.mxu0 0
    %825 = vmatprep.subr.bf16.mxu0 0
    %826 = vmatpush1.bf16.msra.mxu0 0
    %827 = vmatprep.subr.bf16.mxu0 0
    %828 = vmatpush1.bf16.msra.mxu0 0
    %829 = vmatprep.subr.bf16.mxu0 0
    %830 = vmatpush1.bf16.msra.mxu0 0
    %831 = vmatprep.subr.bf16.mxu0 0
    %832 = vmatpush1.bf16.msra.mxu0 0
    %833 = vmatprep.subr.bf16.mxu0 0
    %834 = vmatpush1.bf16.msra.mxu0 0
    %835 = vmatprep.subr.bf16.mxu0 0
    %836 = vmatpush1.bf16.msra.mxu0 0
    %837 = vmatprep.subr.bf16.mxu0 0
    %838 = vmatpush1.bf16.msra.mxu0 %v821
    %839 = vmatprep.subr.bf16.mxu0 0
    %840 = vmatpush2.bf16.msra.mxu0 0
    %841 = vmatprep.subr.bf16.mxu0 0
    %842 = vmatpush2.bf16.msra.mxu0 0
    %843 = vmatprep.subr.bf16.mxu0 0
    %844 = vmatpush2.bf16.msra.mxu0 0
    %845 = vmatprep.subr.bf16.mxu0 0
    %846 = vmatpush2.bf16.msra.mxu0 0
    %847 = vmatprep.subr.bf16.mxu0 0
    %848 = vmatpush2.bf16.msra.mxu0 0
    %849 = vmatprep.subr.bf16.mxu0 0
    %850 = vmatpush2.bf16.msra.mxu0 0
    %851 = vmatprep.subr.bf16.mxu0 0
    %852 = vmatpush2.bf16.msra.mxu0 0
    %853 = vmatprep.subr.bf16.mxu0 0
    %854 = vmatpush2.bf16.msra.mxu0 0
    %855 = vmatprep.mubr.bf16.mxu0 0
    %856 = vmatmul.mubr.bf16.gmra.mxu0 %v818
    %v857 = vpop.f32.mrf.mxu0
    %v858 = vadd.f32 0.0, %v857
    %v859 = vpop.f32.mrf.mxu0
    %v860 = vpop.f32.mrf.mxu0
    %v861 = vpop.f32.mrf.mxu0
    %862 = vdwg.mxu0
    %863 = vrot.lane.b32.xlu0 %v244, 48
    %v864 = vpop.permute.xlu0 %863
    %v866 = vsel %vm248, %v814, 0
    %v869 = vsel %vm375, %v864, 0
    %871 = vmatprep.subr.bf16.mxu0 0
    %872 = vmatpush1.bf16.msra.mxu0 0
    %873 = vmatprep.subr.bf16.mxu0 0
    %874 = vmatpush1.bf16.msra.mxu0 0
    %875 = vmatprep.subr.bf16.mxu0 0
    %876 = vmatpush1.bf16.msra.mxu0 0
    %877 = vmatprep.subr.bf16.mxu0 0
    %878 = vmatpush1.bf16.msra.mxu0 0
    %879 = vmatprep.subr.bf16.mxu0 0
    %880 = vmatpush1.bf16.msra.mxu0 0
    %881 = vmatprep.subr.bf16.mxu0 0
    %882 = vmatpush1.bf16.msra.mxu0 0
    %883 = vmatprep.subr.bf16.mxu0 0
    %884 = vmatpush1.bf16.msra.mxu0 0
    %885 = vmatprep.subr.bf16.mxu0 0
    %886 = vmatpush1.bf16.msra.mxu0 %v869
    %887 = vmatprep.subr.bf16.mxu0 0
    %888 = vmatpush2.bf16.msra.mxu0 0
    %889 = vmatprep.subr.bf16.mxu0 0
    %890 = vmatpush2.bf16.msra.mxu0 0
    %891 = vmatprep.subr.bf16.mxu0 0
    %892 = vmatpush2.bf16.msra.mxu0 0
    %893 = vmatprep.subr.bf16.mxu0 0
    %894 = vmatpush2.bf16.msra.mxu0 0
    %895 = vmatprep.subr.bf16.mxu0 0
    %896 = vmatpush2.bf16.msra.mxu0 0
    %897 = vmatprep.subr.bf16.mxu0 0
    %898 = vmatpush2.bf16.msra.mxu0 0
    %899 = vmatprep.subr.bf16.mxu0 0
    %900 = vmatpush2.bf16.msra.mxu0 0
    %901 = vmatprep.subr.bf16.mxu0 0
    %902 = vmatpush2.bf16.msra.mxu0 0
    %903 = vmatprep.mubr.bf16.mxu0 0
    %904 = vmatmul.mubr.bf16.gmra.mxu0 %v866
    %v905 = vpop.f32.mrf.mxu0
    %v906 = vadd.f32 0.0, %v905
    %v907 = vpop.f32.mrf.mxu0
    %v908 = vpop.f32.mrf.mxu0
    %v909 = vpop.f32.mrf.mxu0
    %910 = vdwg.mxu0
    %911 = vrot.lane.b32.xlu0 %v243, 104
    %v912 = vpop.permute.xlu0 %911
    %913 = vrot.lane.b32.xlu0 %v243, 72
    %v914 = vpop.permute.xlu0 %913
    %v916 = vsel %vm248, %v912, 0
    %v919 = vsel %vm248, %v914, 0
    %921 = vmatprep.subr.bf16.mxu0 0
    %922 = vmatpush1.bf16.xpose.msra.mxu0 0
    %923 = vmatprep.subr.bf16.mxu0 0
    %924 = vmatpush1.bf16.xpose.msra.mxu0 0
    %925 = vmatprep.subr.bf16.mxu0 0
    %926 = vmatpush1.bf16.xpose.msra.mxu0 0
    %927 = vmatprep.subr.bf16.mxu0 0
    %928 = vmatpush1.bf16.xpose.msra.mxu0 0
    %929 = vmatprep.subr.bf16.mxu0 0
    %930 = vmatpush1.bf16.xpose.msra.mxu0 0
    %931 = vmatprep.subr.bf16.mxu0 0
    %932 = vmatpush1.bf16.xpose.msra.mxu0 0
    %933 = vmatprep.subr.bf16.mxu0 0
    %934 = vmatpush1.bf16.xpose.msra.mxu0 0
    %935 = vmatprep.subr.bf16.mxu0 0
    %936 = vmatpush1.bf16.xpose.msra.mxu0 %v919
    %937 = vmatprep.subr.bf16.mxu0 0
    %938 = vmatpush2.bf16.xpose.msra.mxu0 0
    %939 = vmatprep.subr.bf16.mxu0 0
    %940 = vmatpush2.bf16.xpose.msra.mxu0 0
    %941 = vmatprep.subr.bf16.mxu0 0
    %942 = vmatpush2.bf16.xpose.msra.mxu0 0
    %943 = vmatprep.subr.bf16.mxu0 0
    %944 = vmatpush2.bf16.xpose.msra.mxu0 0
    %945 = vmatprep.subr.bf16.mxu0 0
    %946 = vmatpush2.bf16.xpose.msra.mxu0 0
    %947 = vmatprep.subr.bf16.mxu0 0
    %948 = vmatpush2.bf16.xpose.msra.mxu0 0
    %949 = vmatprep.subr.bf16.mxu0 0
    %950 = vmatpush2.bf16.xpose.msra.mxu0 0
    %951 = vmatprep.subr.bf16.mxu0 0
    %952 = vmatpush2.bf16.xpose.msra.mxu0 0
    %953 = vmatprep.mubr.bf16.mxu0 0
    %954 = vmatmul.mubr.bf16.gmra.mxu0 %v916
    %v955 = vpop.f32.mrf.mxu0
    %v956 = vadd.f32 0.0, %v955
    %v957 = vpop.f32.mrf.mxu0
    %v958 = vpop.f32.mrf.mxu0
    %v959 = vpop.f32.mrf.mxu0
    %960 = vdwg.mxu0
    %961 = vrot.lane.b32.xlu0 %v244, 104
    %v962 = vpop.permute.xlu0 %961
    %963 = vrot.lane.b32.xlu0 %v244, 72
    %v964 = vpop.permute.xlu0 %963
    %v966 = vsel %vm248, %v962, 0
    %v969 = vsel %vm248, %v964, 0
    %971 = vmatprep.subr.bf16.mxu0 0
    %972 = vmatpush1.bf16.xpose.msra.mxu0 0
    %973 = vmatprep.subr.bf16.mxu0 0
    %974 = vmatpush1.bf16.xpose.msra.mxu0 0
    %975 = vmatprep.subr.bf16.mxu0 0
    %976 = vmatpush1.bf16.xpose.msra.mxu0 0
    %977 = vmatprep.subr.bf16.mxu0 0
    %978 = vmatpush1.bf16.xpose.msra.mxu0 0
    %979 = vmatprep.subr.bf16.mxu0 0
    %980 = vmatpush1.bf16.xpose.msra.mxu0 0
    %981 = vmatprep.subr.bf16.mxu0 0
    %982 = vmatpush1.bf16.xpose.msra.mxu0 0
    %983 = vmatprep.subr.bf16.mxu0 0
    %984 = vmatpush1.bf16.xpose.msra.mxu0 0
    %985 = vmatprep.subr.bf16.mxu0 0
    %986 = vmatpush1.bf16.xpose.msra.mxu0 %v969
    %987 = vmatprep.subr.bf16.mxu0 0
    %988 = vmatpush2.bf16.xpose.msra.mxu0 0
    %989 = vmatprep.subr.bf16.mxu0 0
    %990 = vmatpush2.bf16.xpose.msra.mxu0 0
    %991 = vmatprep.subr.bf16.mxu0 0
    %992 = vmatpush2.bf16.xpose.msra.mxu0 0
    %993 = vmatprep.subr.bf16.mxu0 0
    %994 = vmatpush2.bf16.xpose.msra.mxu0 0
    %995 = vmatprep.subr.bf16.mxu0 0
    %996 = vmatpush2.bf16.xpose.msra.mxu0 0
    %997 = vmatprep.subr.bf16.mxu0 0
    %998 = vmatpush2.bf16.xpose.msra.mxu0 0
    %999 = vmatprep.subr.bf16.mxu0 0
    %1000 = vmatpush2.bf16.xpose.msra.mxu0 0
    %1001 = vmatprep.subr.bf16.mxu0 0
    %1002 = vmatpush2.bf16.xpose.msra.mxu0 0
    %1003 = vmatprep.mubr.bf16.mxu0 0
    %1004 = vmatmul.mubr.bf16.gmra.mxu0 %v966
    %v1005 = vpop.f32.mrf.mxu0
    %v1006 = vadd.f32 0.0, %v1005
    %v1007 = vpop.f32.mrf.mxu0
    %v1008 = vpop.f32.mrf.mxu0
    %v1009 = vpop.f32.mrf.mxu0
    %1010 = vdwg.mxu0
    %v1011 = vmul.f32 %v956, 0.35355338
    %v1012 = vmul.f32 %v1006, 0.35355338
    %v1013 = vsel %vm248, %v1011, -inf
    %1014 = vmax.xlane.f32.xlu0 %v1013
    %v1015 = vpop.xlane.xlu0 %1014
    %v1016 = vsel %vm248, %v1012, -inf
    %1017 = vmax.xlane.f32.xlu0 %v1016
    %v1018 = vpop.xlane.xlu0 %1017
    %v1019 = vsub.f32 %v1011, %v1015
    %v1020 = vsub.f32 %v1012, %v1018
    %v1021 = vmul.f32 %v1019, 1.442695
    %v1022 = vpow.pop %v1021
    %v1023 = vmul.f32 %v1020, 1.442695
    %v1024 = vpow.pop %v1023
    %v1025 = vsel %vm248, %v1022, 0.0
    %1026 = vadd.xlane.f32.xlu0 %v1025
    %v1027 = vpop.xlane.xlu0 %1026
    %v1028 = vsel %vm248, %v1024, 0.0
    %1029 = vadd.xlane.f32.xlu0 %v1028
    %v1030 = vpop.xlane.xlu0 %1029
    %v1031 = vrcp.pop %v1027
    %v1032 = vrcp.pop %v1030
    %v1033 = vmul.f32 %v1022, %v1031
    %v1034 = vmul.f32 %v1024, %v1032
    %v1035 = vpack.c.bf16 %v1033, %v1033
    %v1036 = vpack.c.bf16 %v1034, %v1034
    %1037 = vrot.lane.b32.xlu0 %v243, 40
    %v1038 = vpop.permute.xlu0 %1037
    %v1040 = vsel %vm248, %v1035, 0
    %v1043 = vsel %vm375, %v1038, 0
    %1045 = vmatprep.subr.bf16.mxu0 0
    %1046 = vmatpush1.bf16.msra.mxu0 0
    %1047 = vmatprep.subr.bf16.mxu0 0
    %1048 = vmatpush1.bf16.msra.mxu0 0
    %1049 = vmatprep.subr.bf16.mxu0 0
    %1050 = vmatpush1.bf16.msra.mxu0 0
    %1051 = vmatprep.subr.bf16.mxu0 0
    %1052 = vmatpush1.bf16.msra.mxu0 0
    %1053 = vmatprep.subr.bf16.mxu0 0
    %1054 = vmatpush1.bf16.msra.mxu0 0
    %1055 = vmatprep.subr.bf16.mxu0 0
    %1056 = vmatpush1.bf16.msra.mxu0 0
    %1057 = vmatprep.subr.bf16.mxu0 0
    %1058 = vmatpush1.bf16.msra.mxu0 0
    %1059 = vmatprep.subr.bf16.mxu0 0
    %1060 = vmatpush1.bf16.msra.mxu0 %v1043
    %1061 = vmatprep.subr.bf16.mxu0 0
    %1062 = vmatpush2.bf16.msra.mxu0 0
    %1063 = vmatprep.subr.bf16.mxu0 0
    %1064 = vmatpush2.bf16.msra.mxu0 0
    %1065 = vmatprep.subr.bf16.mxu0 0
    %1066 = vmatpush2.bf16.msra.mxu0 0
    %1067 = vmatprep.subr.bf16.mxu0 0
    %1068 = vmatpush2.bf16.msra.mxu0 0
    %1069 = vmatprep.subr.bf16.mxu0 0
    %1070 = vmatpush2.bf16.msra.mxu0 0
    %1071 = vmatprep.subr.bf16.mxu0 0
    %1072 = vmatpush2.bf16.msra.mxu0 0
    %1073 = vmatprep.subr.bf16.mxu0 0
    %1074 = vmatpush2.bf16.msra.mxu0 0
    %1075 = vmatprep.subr.bf16.mxu0 0
    %1076 = vmatpush2.bf16.msra.mxu0 0
    %1077 = vmatprep.mubr.bf16.mxu0 0
    %1078 = vmatmul.mubr.bf16.gmra.mxu0 %v1040
    %v1079 = vpop.f32.mrf.mxu0
    %v1080 = vadd.f32 0.0, %v1079
    %v1081 = vpop.f32.mrf.mxu0
    %v1082 = vpop.f32.mrf.mxu0
    %v1083 = vpop.f32.mrf.mxu0
    %1084 = vdwg.mxu0
    %1085 = vrot.lane.b32.xlu0 %v244, 40
    %v1086 = vpop.permute.xlu0 %1085
    %v1088 = vsel %vm248, %v1036, 0
    %v1091 = vsel %vm375, %v1086, 0
    %1093 = vmatprep.subr.bf16.mxu0 0
    %1094 = vmatpush1.bf16.msra.mxu0 0
    %1095 = vmatprep.subr.bf16.mxu0 0
    %1096 = vmatpush1.bf16.msra.mxu0 0
    %1097 = vmatprep.subr.bf16.mxu0 0
    %1098 = vmatpush1.bf16.msra.mxu0 0
    %1099 = vmatprep.subr.bf16.mxu0 0
    %1100 = vmatpush1.bf16.msra.mxu0 0
    %1101 = vmatprep.subr.bf16.mxu0 0
    %1102 = vmatpush1.bf16.msra.mxu0 0
    %1103 = vmatprep.subr.bf16.mxu0 0
    %1104 = vmatpush1.bf16.msra.mxu0 0
    %1105 = vmatprep.subr.bf16.mxu0 0
    %1106 = vmatpush1.bf16.msra.mxu0 0
    %1107 = vmatprep.subr.bf16.mxu0 0
    %1108 = vmatpush1.bf16.msra.mxu0 %v1091
    %1109 = vmatprep.subr.bf16.mxu0 0
    %1110 = vmatpush2.bf16.msra.mxu0 0
    %1111 = vmatprep.subr.bf16.mxu0 0
    %1112 = vmatpush2.bf16.msra.mxu0 0
    %1113 = vmatprep.subr.bf16.mxu0 0
    %1114 = vmatpush2.bf16.msra.mxu0 0
    %1115 = vmatprep.subr.bf16.mxu0 0
    %1116 = vmatpush2.bf16.msra.mxu0 0
    %1117 = vmatprep.subr.bf16.mxu0 0
    %1118 = vmatpush2.bf16.msra.mxu0 0
    %1119 = vmatprep.subr.bf16.mxu0 0
    %1120 = vmatpush2.bf16.msra.mxu0 0
    %1121 = vmatprep.subr.bf16.mxu0 0
    %1122 = vmatpush2.bf16.msra.mxu0 0
    %1123 = vmatprep.subr.bf16.mxu0 0
    %1124 = vmatpush2.bf16.msra.mxu0 0
    %1125 = vmatprep.mubr.bf16.mxu0 0
    %1126 = vmatmul.mubr.bf16.gmra.mxu0 %v1088
    %v1127 = vpop.f32.mrf.mxu0
    %v1128 = vadd.f32 0.0, %v1127
    %v1129 = vpop.f32.mrf.mxu0
    %v1130 = vpop.f32.mrf.mxu0
    %v1131 = vpop.f32.mrf.mxu0
    %1132 = vdwg.mxu0
    %1135 = vrot.lane.b32.xlu0 %v636, 8
    %v1136 = vpop.permute.xlu0 %1135
    %1137 = vrot.lane.b32.xlu0 %v684, 8
    %v1138 = vpop.permute.xlu0 %1137
    %1143 = vrot.lane.b32.xlu0 %v858, 16
    %v1144 = vpop.permute.xlu0 %1143
    %1145 = vrot.lane.b32.xlu0 %v906, 16
    %v1146 = vpop.permute.xlu0 %1145
    %1151 = vrot.lane.b32.xlu0 %v1080, 24
    %v1152 = vpop.permute.xlu0 %1151
    %1153 = vrot.lane.b32.xlu0 %v1128, 24
    %v1154 = vpop.permute.xlu0 %1153
    %v1157 = vsel %vm248, %v414, %v1136
    %v1158 = vsel %vm248, %v462, %v1138
    %v1159 = vsel %vm161, %v1157, %v1144
    %v1160 = vsel %vm161, %v1158, %v1146
    %vm1161 = vcmask 195584
    %v1162 = vsel %vm1161, %v1159, %v1152
    %v1163 = vsel %vm1161, %v1160, %v1154
    %v1164 = vpack.c.bf16 %v1163, %v1162
    %v1169 = vunpack.c.l.b16 %v61
    %v1170 = vunpack.c.l.b16 %v62
    %v1171 = vunpack.c.l.b16 %v63
    %v1172 = vunpack.c.l.b16 %v64
    %v1173 = vpack.c.b16 %v1170, %v1169
    %v1174 = vpack.c.b16 %v1172, %v1171
    %v1178 = vsel %vm116, %v1164, 0
    %1180 = vmatprep.subr.bf16.mxu0 0
    %1181 = vmatpush1.bf16.msra.mxu0 0
    %1182 = vmatprep.subr.bf16.mxu0 0
    %1183 = vmatpush1.bf16.msra.mxu0 0
    %1184 = vmatprep.subr.bf16.mxu0 0
    %1185 = vmatpush1.bf16.msra.mxu0 0
    %1186 = vmatprep.subr.bf16.mxu0 0
    %1187 = vmatpush1.bf16.msra.mxu0 0
    %1188 = vmatprep.subr.bf16.mxu0 0
    %1189 = vmatpush1.bf16.msra.mxu0 0
    %1190 = vmatprep.subr.bf16.mxu0 0
    %1191 = vmatpush1.bf16.msra.mxu0 0
    %1192 = vmatprep.subr.bf16.mxu0 0
    %1193 = vmatpush1.bf16.msra.mxu0 %v1174
    %1194 = vmatprep.subr.bf16.mxu0 0
    %1195 = vmatpush1.bf16.msra.mxu0 %v1173
    %1196 = vmatprep.subr.bf16.mxu0 0
    %1197 = vmatpush2.bf16.msra.mxu0 0
    %1198 = vmatprep.subr.bf16.mxu0 0
    %1199 = vmatpush2.bf16.msra.mxu0 0
    %1200 = vmatprep.subr.bf16.mxu0 0
    %1201 = vmatpush2.bf16.msra.mxu0 0
    %1202 = vmatprep.subr.bf16.mxu0 0
    %1203 = vmatpush2.bf16.msra.mxu0 0
    %1204 = vmatprep.subr.bf16.mxu0 0
    %1205 = vmatpush2.bf16.msra.mxu0 0
    %1206 = vmatprep.subr.bf16.mxu0 0
    %1207 = vmatpush2.bf16.msra.mxu0 0
    %1208 = vmatprep.subr.bf16.mxu0 0
    %1209 = vmatpush2.bf16.msra.mxu0 0
    %1210 = vmatprep.subr.bf16.mxu0 0
    %1211 = vmatpush2.bf16.msra.mxu0 0
    %1212 = vmatprep.mubr.bf16.mxu0 0
    %1213 = vmatmul.mubr.bf16.gmra.mxu0 %v1178
    %v1214 = vpop.f32.mrf.mxu0
    %v1215 = vadd.f32 0.0, %v1214
    %v1216 = vpop.f32.mrf.mxu0
    %v1217 = vpop.f32.mrf.mxu0
    %v1218 = vadd.f32 0.0, %v1217
    %v1219 = vpop.f32.mrf.mxu0
    %1220 = vdwg.mxu0
    %v1221 = vlaneseq
    %v1222 = vshrl.u32 %v1221, 7
    %v1223 = vsub.s32 0, %v1222
    %v1224 = vrot.slane %v87, %v1223
    %v1226 = vsel %vm161, %v95, 0
    %v1229 = vsel %vm161, %v96, 0
    %1231 = vmatprep.subr.mxu0 0.0
    %1232 = vmatpush1.msra.mxu0 0.0
    %1233 = vmatprep.subr.mxu0 0.0
    %1234 = vmatpush1.msra.mxu0 0.0
    %1235 = vmatprep.subr.mxu0 0.0
    %1236 = vmatpush1.msra.mxu0 0.0
    %1237 = vmatprep.subr.mxu0 0.0
    %1238 = vmatpush1.msra.mxu0 0.0
    %1239 = vmatprep.subr.mxu0 0.0
    %1240 = vmatpush1.msra.mxu0 0.0
    %1241 = vmatprep.subr.mxu0 0.0
    %1242 = vmatpush1.msra.mxu0 0.0
    %1243 = vmatprep.subr.mxu0 0.0
    %1244 = vmatpush1.msra.mxu0 0.0
    %1245 = vmatprep.subr.mxu0 0.0
    %1246 = vmatpush1.msra.mxu0 0.0
    %1247 = vmatprep.subr.mxu0 0.0
    %1248 = vmatpush1.msra.mxu0 0.0
    %1249 = vmatprep.subr.mxu0 0.0
    %1250 = vmatpush1.msra.mxu0 0.0
    %1251 = vmatprep.subr.mxu0 0.0
    %1252 = vmatpush1.msra.mxu0 0.0
    %1253 = vmatprep.subr.mxu0 0.0
    %1254 = vmatpush1.msra.mxu0 0.0
    %1255 = vmatprep.subr.mxu0 0.0
    %1256 = vmatpush1.msra.mxu0 0.0
    %1257 = vmatprep.subr.mxu0 0.0
    %1258 = vmatpush1.msra.mxu0 0.0
    %1259 = vmatprep.subr.mxu0 0.0
    %1260 = vmatpush1.msra.mxu0 %v1218
    %1261 = vmatprep.subr.mxu0 0.0
    %1262 = vmatpush1.msra.mxu0 %v1215
    %1263 = vmatprep.subr.mxu0 0.0
    %1264 = vmatpush2.msra.mxu0 0.0
    %1265 = vmatprep.subr.mxu0 0.0
    %1266 = vmatpush2.msra.mxu0 0.0
    %1267 = vmatprep.subr.mxu0 0.0
    %1268 = vmatpush2.msra.mxu0 0.0
    %1269 = vmatprep.subr.mxu0 0.0
    %1270 = vmatpush2.msra.mxu0 0.0
    %1271 = vmatprep.subr.mxu0 0.0
    %1272 = vmatpush2.msra.mxu0 0.0
    %1273 = vmatprep.subr.mxu0 0.0
    %1274 = vmatpush2.msra.mxu0 0.0
    %1275 = vmatprep.subr.mxu0 0.0
    %1276 = vmatpush2.msra.mxu0 0.0
    %1277 = vmatprep.subr.mxu0 0.0
    %1278 = vmatpush2.msra.mxu0 0.0
    %1279 = vmatprep.subr.mxu0 0.0
    %1280 = vmatpush2.msra.mxu0 0.0
    %1281 = vmatprep.subr.mxu0 0.0
    %1282 = vmatpush2.msra.mxu0 0.0
    %1283 = vmatprep.subr.mxu0 0.0
    %1284 = vmatpush2.msra.mxu0 0.0
    %1285 = vmatprep.subr.mxu0 0.0
    %1286 = vmatpush2.msra.mxu0 0.0
    %1287 = vmatprep.subr.mxu0 0.0
    %1288 = vmatpush2.msra.mxu0 0.0
    %1289 = vmatprep.subr.mxu0 0.0
    %1290 = vmatpush2.msra.mxu0 0.0
    %1291 = vmatprep.subr.mxu0 0.0
    %1292 = vmatpush2.msra.mxu0 0.0
    %1293 = vmatprep.subr.mxu0 0.0
    %1294 = vmatpush2.msra.mxu0 0.0
    %1295 = vmatprep.mubr.f32.mxu0 0.0
    %1296 = vmatmul.mubr.f32.gmra.mxu0 %v1226
    %v1297 = vpop.f32.mrf.mxu0
    %v1298 = vadd.f32 %v1224, %v1297
    %v1299 = vpop.f32.mrf.mxu0
    %1300 = vmatprep.mubr.f32.mxu0 0.0
    %1301 = vmatmul.mubr.f32.gmra.mxu0 %v1229
    %v1302 = vpop.f32.mrf.mxu0
    %v1303 = vadd.f32 %v1224, %v1302
    %v1304 = vpop.f32.mrf.mxu0
    %1305 = vdwg.mxu0
    %v1306 = vadd.f32 %v97, %v1298
    %v1307 = vadd.f32 %v98, %v1303
    %v1308 = vsel %vm116, %v1306, 0.0
    %v1309 = vsel %vm116, %v1307, 0.0
    %v1310 = vadd.f32 %v1308, %v1309
    %v1311 = vrot.slane %v1310, 4
    %v1312 = vadd.f32 %v1310, %v1311
    %v1313 = vrot.slane %v1312, 2
    %v1314 = vadd.f32 %v1312, %v1313
    %v1315 = vrot.slane %v1314, 1
    %v1316 = vadd.f32 %v1314, %v1315
    %v1317 = vrcp.pop 16.0
    %v1318 = vmul.f32 %v1316, %v1317
    %v1319 = vmul.f32 %v1306, %v1306
    %v1320 = vmul.f32 %v1307, %v1307
    %v1321 = vsel %vm116, %v1319, 0.0
    %v1322 = vsel %vm116, %v1320, 0.0
    %v1323 = vadd.f32 %v1321, %v1322
    %v1324 = vrot.slane %v1323, 4
    %v1325 = vadd.f32 %v1323, %v1324
    %v1326 = vrot.slane %v1325, 2
    %v1327 = vadd.f32 %v1325, %v1326
    %v1328 = vrot.slane %v1327, 1
    %v1329 = vadd.f32 %v1327, %v1328
    %v1330 = vmul.f32 %v1329, %v1317
    %v1331 = vmul.f32 %v1318, %v1318
    %v1332 = vsub.f32 %v1330, %v1331
    %v1333 = vsub.f32 %v1306, %v1318
    %v1334 = vsub.f32 %v1307, %v1318
    %v1335 = vadd.f32 %v1332, 1e-05
    %v1336 = vrsqrt.pop %v1335
    %v1337 = vmul.f32 %v1333, %v1336
    %v1338 = vmul.f32 %v1334, %v1336
    %v1339 = vlaneseq
    %v1340 = vshrl.u32 %v1339, 7
    %v1341 = vsub.s32 0, %v1340
    %v1342 = vrot.slane %v89, %v1341
    %v1343 = vmul.f32 %v1337, %v1342
    %v1344 = vmul.f32 %v1338, %v1342
    %v1345 = vlaneseq
    %v1346 = vshrl.u32 %v1345, 7
    %v1347 = vsub.s32 0, %v1346
    %v1348 = vrot.slane %v90, %v1347
    %v1349 = vadd.f32 %v1343, %v1348
    %v1350 = vadd.f32 %v1344, %v1348
    %v1351 = vpack.c.bf16 %v1350, %v1349
    %v1352 = vlaneseq
    %v1353 = vshrl.u32 %v1352, 7
    %v1354 = vsub.s32 0, %v1353
    %v1355 = vrot.slane %v86, %v1354
    %v1360 = vunpack.c.l.b16 %v65
    %v1361 = vunpack.c.l.b16 %v66
    %v1362 = vunpack.c.l.b16 %v67
    %v1363 = vunpack.c.l.b16 %v68
    %v1364 = vpack.c.b16 %v1361, %v1360
    %v1365 = vpack.c.b16 %v1363, %v1362
    %v1369 = vsel %vm116, %v1351, 0
    %1371 = vmatprep.subr.bf16.mxu0 0
    %1372 = vmatpush1.bf16.msra.mxu0 0
    %1373 = vmatprep.subr.bf16.mxu0 0
    %1374 = vmatpush1.bf16.msra.mxu0 0
    %1375 = vmatprep.subr.bf16.mxu0 0
    %1376 = vmatpush1.bf16.msra.mxu0 0
    %1377 = vmatprep.subr.bf16.mxu0 0
    %1378 = vmatpush1.bf16.msra.mxu0 0
    %1379 = vmatprep.subr.bf16.mxu0 0
    %1380 = vmatpush1.bf16.msra.mxu0 0
    %1381 = vmatprep.subr.bf16.mxu0 0
    %1382 = vmatpush1.bf16.msra.mxu0 0
    %1383 = vmatprep.subr.bf16.mxu0 0
    %1384 = vmatpush1.bf16.msra.mxu0 %v1365
    %1385 = vmatprep.subr.bf16.mxu0 0
    %1386 = vmatpush1.bf16.msra.mxu0 %v1364
    %1387 = vmatprep.subr.bf16.mxu0 0
    %1388 = vmatpush2.bf16.msra.mxu0 0
    %1389 = vmatprep.subr.bf16.mxu0 0
    %1390 = vmatpush2.bf16.msra.mxu0 0
    %1391 = vmatprep.subr.bf16.mxu0 0
    %1392 = vmatpush2.bf16.msra.mxu0 0
    %1393 = vmatprep.subr.bf16.mxu0 0
    %1394 = vmatpush2.bf16.msra.mxu0 0
    %1395 = vmatprep.subr.bf16.mxu0 0
    %1396 = vmatpush2.bf16.msra.mxu0 0
    %1397 = vmatprep.subr.bf16.mxu0 0
    %1398 = vmatpush2.bf16.msra.mxu0 0
    %1399 = vmatprep.subr.bf16.mxu0 0
    %1400 = vmatpush2.bf16.msra.mxu0 0
    %1401 = vmatprep.subr.bf16.mxu0 0
    %1402 = vmatpush2.bf16.msra.mxu0 0
    %1403 = vmatprep.mubr.bf16.mxu0 0
    %1404 = vmatmul.mubr.bf16.gmra.mxu0 %v1369
    %v1405 = vpop.f32.mrf.mxu0
    %v1406 = vadd.f32 %v1355, %v1405
    %v1407 = vpop.f32.mrf.mxu0
    %v1408 = vpop.f32.mrf.mxu0
    %v1409 = vadd.f32 %v1355, %v1408
    %v1410 = vpop.f32.mrf.mxu0
    %1411 = vdwg.mxu0
    %v1412 = vmul.f32 %v1406, 0.5
    %v1413 = vmul.f32 %v1409, 0.5
    %v1414 = vmul.f32 %v1406, 0.70710677
    %v1415 = vmul.f32 %v1409, 0.70710677
    %vm1416 = vcmp.ge.f32.partialorder %v1414, 0.0
    %vm1417 = vcmp.ge.f32.partialorder %v1415, 0.0
    %v1418 = vsel %vm1416, 1.0, -1.0
    %v1419 = vsel %vm1417, 1.0, -1.0
    %v1420 = vand.u32 2147483647, %v1414
    %v1421 = vand.u32 2147483647, %v1415
    %v1422 = vmul.f32 %v1420, 0.3275911
    %v1423 = vmul.f32 %v1421, 0.3275911
    %v1424 = vadd.f32 %v1422, 1.0
    %v1425 = vadd.f32 %v1423, 1.0
    %v1426 = vrcp.pop %v1424
    %v1427 = vmul.f32 1.0, %v1426
    %v1428 = vrcp.pop %v1425
    %v1429 = vmul.f32 1.0, %v1428
    %v1430 = vmul.f32 %v1427, 1.0614054
    %v1431 = vmul.f32 %v1429, 1.0614054
    %v1432 = vadd.f32 %v1430, -1.4531521
    %v1433 = vadd.f32 %v1431, -1.4531521
    %v1434 = vmul.f32 %v1432, %v1427
    %v1435 = vmul.f32 %v1433, %v1429
    %v1436 = vadd.f32 %v1434, 1.4214138
    %v1437 = vadd.f32 %v1435, 1.4214138
    %v1438 = vmul.f32 %v1436, %v1427
    %v1439 = vmul.f32 %v1437, %v1429
    %v1440 = vadd.f32 %v1438, -0.28449672
    %v1441 = vadd.f32 %v1439, -0.28449672
    %v1442 = vmul.f32 %v1440, %v1427
    %v1443 = vmul.f32 %v1441, %v1429
    %v1444 = vadd.f32 %v1442, 0.2548296
    %v1445 = vadd.f32 %v1443, 0.2548296
    %v1446 = vmul.f32 %v1444, %v1427
    %v1447 = vmul.f32 %v1445, %v1429
    %v1448 = vsub.f32 0.0, %v1420
    %v1449 = vsub.f32 0.0, %v1421
    %v1450 = vmul.f32 %v1448, %v1420
    %v1451 = vmul.f32 %v1449, %v1421
    %v1452 = vmul.f32 %v1450, 1.442695
    %v1453 = vpow.pop %v1452
    %v1454 = vmul.f32 %v1451, 1.442695
    %v1455 = vpow.pop %v1454
    %v1456 = vmul.f32 %v1446, %v1453
    %v1457 = vmul.f32 %v1447, %v1455
    %v1458 = vsub.f32 1.0, %v1456
    %v1459 = vsub.f32 1.0, %v1457
    %v1460 = vmul.f32 %v1418, %v1458
    %v1461 = vmul.f32 %v1419, %v1459
    %v1462 = vadd.f32 %v1460, 1.0
    %v1463 = vadd.f32 %v1461, 1.0
    %v1464 = vmul.f32 %v1412, %v1462
    %v1465 = vmul.f32 %v1413, %v1463
    %v1466 = vpack.c.bf16 %v1465, %v1464
    %v1467 = vlaneseq
    %v1468 = vshrl.u32 %v1467, 7
    %v1469 = vsub.s32 0, %v1468
    %v1470 = vrot.slane %v88, %v1469
    %v1487 = vunpack.c.l.b16 %v69
    %v1488 = vunpack.c.l.b16 %v70
    %v1489 = vunpack.c.l.b16 %v71
    %v1490 = vunpack.c.l.b16 %v72
    %v1491 = vunpack.c.l.b16 %v73
    %v1492 = vunpack.c.l.b16 %v74
    %v1493 = vunpack.c.l.b16 %v75
    %v1494 = vunpack.c.l.b16 %v76
    %v1495 = vunpack.c.l.b16 %v77
    %v1496 = vunpack.c.l.b16 %v78
    %v1497 = vunpack.c.l.b16 %v79
    %v1498 = vunpack.c.l.b16 %v80
    %v1499 = vunpack.c.l.b16 %v81
    %v1500 = vunpack.c.l.b16 %v82
    %v1501 = vunpack.c.l.b16 %v83
    %v1502 = vunpack.c.l.b16 %v84
    %v1503 = vpack.c.b16 %v1488, %v1487
    %v1504 = vpack.c.b16 %v1490, %v1489
    %v1505 = vpack.c.b16 %v1492, %v1491
    %v1506 = vpack.c.b16 %v1494, %v1493
    %v1507 = vpack.c.b16 %v1496, %v1495
    %v1508 = vpack.c.b16 %v1498, %v1497
    %v1509 = vpack.c.b16 %v1500, %v1499
    %v1510 = vpack.c.b16 %v1502, %v1501
    %1519 = vmatprep.subr.bf16.mxu0 0
    %1520 = vmatpush1.bf16.msra.mxu0 %v1510
    %1521 = vmatprep.subr.bf16.mxu0 0
    %1522 = vmatpush1.bf16.msra.mxu0 %v1509
    %1523 = vmatprep.subr.bf16.mxu0 0
    %1524 = vmatpush1.bf16.msra.mxu0 %v1508
    %1525 = vmatprep.subr.bf16.mxu0 0
    %1526 = vmatpush1.bf16.msra.mxu0 %v1507
    %1527 = vmatprep.subr.bf16.mxu0 0
    %1528 = vmatpush1.bf16.msra.mxu0 %v1506
    %1529 = vmatprep.subr.bf16.mxu0 0
    %1530 = vmatpush1.bf16.msra.mxu0 %v1505
    %1531 = vmatprep.subr.bf16.mxu0 0
    %1532 = vmatpush1.bf16.msra.mxu0 %v1504
    %1533 = vmatprep.subr.bf16.mxu0 0
    %1534 = vmatpush1.bf16.msra.mxu0 %v1503
    %1535 = vmatprep.subr.bf16.mxu0 0
    %1536 = vmatpush2.bf16.msra.mxu0 0
    %1537 = vmatprep.subr.bf16.mxu0 0
    %1538 = vmatpush2.bf16.msra.mxu0 0
    %1539 = vmatprep.subr.bf16.mxu0 0
    %1540 = vmatpush2.bf16.msra.mxu0 0
    %1541 = vmatprep.subr.bf16.mxu0 0
    %1542 = vmatpush2.bf16.msra.mxu0 0
    %1543 = vmatprep.subr.bf16.mxu0 0
    %1544 = vmatpush2.bf16.msra.mxu0 0
    %1545 = vmatprep.subr.bf16.mxu0 0
    %1546 = vmatpush2.bf16.msra.mxu0 0
    %1547 = vmatprep.subr.bf16.mxu0 0
    %1548 = vmatpush2.bf16.msra.mxu0 0
    %1549 = vmatprep.subr.bf16.mxu0 0
    %1550 = vmatpush2.bf16.msra.mxu0 0
    %1551 = vmatprep.mubr.bf16.mxu0 0
    %1552 = vmatmul.mubr.bf16.gmra.mxu0 %v1466
    %v1553 = vpop.f32.mrf.mxu0
    %v1554 = vadd.f32 %v1470, %v1553
    %v1555 = vpop.f32.mrf.mxu0
    %v1556 = vpop.f32.mrf.mxu0
    %v1557 = vadd.f32 %v1470, %v1556
    %v1558 = vpop.f32.mrf.mxu0
    %1559 = vdwg.mxu0
    %v1560 = vadd.f32 %v1349, %v1554
    %v1561 = vadd.f32 %v1350, %v1557
    %v1562 = vsel %vm116, %v1560, 0.0
    %v1563 = vsel %vm116, %v1561, 0.0
    %v1564 = vadd.f32 %v1562, %v1563
    %v1565 = vrot.slane %v1564, 4
    %v1566 = vadd.f32 %v1564, %v1565
    %v1567 = vrot.slane %v1566, 2
    %v1568 = vadd.f32 %v1566, %v1567
    %v1569 = vrot.slane %v1568, 1
    %v1570 = vadd.f32 %v1568, %v1569
    %v1571 = vmul.f32 %v1570, %v1317
    %v1572 = vmul.f32 %v1560, %v1560
    %v1573 = vmul.f32 %v1561, %v1561
    %v1574 = vsel %vm116, %v1572, 0.0
    %v1575 = vsel %vm116, %v1573, 0.0
    %v1576 = vadd.f32 %v1574, %v1575
    %v1577 = vrot.slane %v1576, 4
    %v1578 = vadd.f32 %v1576, %v1577
    %v1579 = vrot.slane %v1578, 2
    %v1580 = vadd.f32 %v1578, %v1579
    %v1581 = vrot.slane %v1580, 1
    %v1582 = vadd.f32 %v1580, %v1581
    %v1583 = vmul.f32 %v1582, %v1317
    %v1584 = vmul.f32 %v1571, %v1571
    %v1585 = vsub.f32 %v1583, %v1584
    %v1586 = vsub.f32 %v1560, %v1571
    %v1587 = vsub.f32 %v1561, %v1571
    %v1588 = vadd.f32 %v1585, 1e-05
    %v1589 = vrsqrt.pop %v1588
    %v1590 = vmul.f32 %v1586, %v1589
    %v1591 = vmul.f32 %v1587, %v1589
    %v1592 = vlaneseq
    %v1593 = vshrl.u32 %v1592, 7
    %v1594 = vsub.s32 0, %v1593
    %v1595 = vrot.slane %v91, %v1594
    %v1596 = vmul.f32 %v1590, %v1595
    %v1597 = vmul.f32 %v1591, %v1595
    %v1598 = vlaneseq
    %v1599 = vshrl.u32 %v1598, 7
    %v1600 = vsub.s32 0, %v1599
    %v1601 = vrot.slane %v92, %v1600
    %v1602 = vadd.f32 %v1596, %v1601
    %v1603 = vadd.f32 %v1597, %v1601
    %1604 = vst.msk [vmem:[#allocation8] sm:$0xff] %vm116, %v1602
    %1605 = vst.msk [vmem:[#allocation8 + $0x8] sm:$0xff] %vm116, %v1603
    // Predicated region
    $region26: #{encoder_mtsc_forward.1} parent=1 // pred_check
      _
    $region27: #{encoder_mtsc_forward.1} parent=1 // pred_check_branch
      %1607 = sbr.rel (0) target = $region29
    $region28: #{encoder_mtsc_forward.1} parent=1 // pred_region
      %s1609 = ssub.s32 256, 256
      %1610 = vsyncadd [#allocation4], %s1609
      %s1611 = sshll.u32 [#allocation8], 4
      %s1612 = int_to_ptr.vmem [resolvable:$true] %s1611
      %1617 = dma.vmem_to_hbm [thread:$0]  %s1612, 256, %s3, [#allocation4], 128, 128, 8
    $region29: #{encoder_mtsc_forward.1} parent=1 // pred_fallthru
      _
    // Predicated region
    $region30: #{encoder_mtsc_forward.1} parent=1 // pred_check
      _
    $region31: #{encoder_mtsc_forward.1} parent=1 // pred_check_branch
      %1619 = sbr.rel (0) target = $region33
    $region32: #{encoder_mtsc_forward.1} parent=1 // pred_region
      %1620 = dma.done [#allocation4], 256
    $region33: #{encoder_mtsc_forward.1} parent=1 // pred_fallthru
      _
    %1621 = vsyncpa [#allocation3], 1
    %1622 = vsyncpa [#allocation6], 1
    %1623 = vsyncpa [#allocation4], 1

</llo_original>
